<compile_context>
chip_gen: v6e
topology: v6e:2x2x1
jax: 0.10.0
libtpu: 0.0.40
codegen_flags: <defaults>
</compile_context>

<pallas_src>
import math

import jax
import jax.numpy as jnp
from jax.experimental import pallas as pl
from jax.experimental.pallas import tpu as pltpu

# ---------------------------------------------------------------------------
# model hyper-params (small, consistent with the module's forward semantics)
# ---------------------------------------------------------------------------
B = 2          # batch_size
L = 8          # src_len
D = 32         # d_model
H = 4          # num_head
DK = D // H    # per-head dim
F = 64         # d_ff
EPS = 1e-5     # nn.LayerNorm default eps


def _layernorm(x, gamma, beta):
    # PyTorch LayerNorm: biased variance over the last dim.
    mu = jnp.mean(x, axis=-1, keepdims=True)
    var = jnp.mean((x - mu) ** 2, axis=-1, keepdims=True)
    return (x - mu) * jax.lax.rsqrt(var + EPS) * gamma + beta


def encoder_layer_kernel(
    x_ref, bias_ref,
    wqkv_ref, bqkv_ref, wo_ref, bo_ref,
    ln1g_ref, ln1b_ref,
    w1_ref, b1_ref, w2_ref, b2_ref,
    ln2g_ref, ln2b_ref,
    out_ref,
    attn_scr,
):
    x = x_ref[...]                                           # (B*L, D)

    # --- fused QKV projection: one (B*L, D) @ (D, 3D) MXU matmul ---
    qkv = jnp.dot(x, wqkv_ref[...], preferred_element_type=jnp.float32) + bqkv_ref[...]
    q = qkv[:, 0 * D:1 * D]      # already scaled by 1/sqrt(DK) (folded into Wq/bq)
    k = qkv[:, 1 * D:2 * D]
    v = qkv[:, 2 * D:3 * D]

    # --- scaled dot-product attention, per batch element / head (static unroll) ---
    for b in range(B):
        rows = slice(b * L, (b + 1) * L)
        bias = bias_ref[b]                                   # (L, L) additive mask
        qb, kb, vb = q[rows, :], k[rows, :], v[rows, :]
        for h in range(H):
            cols = slice(h * DK, (h + 1) * DK)
            qh, kh, vh = qb[:, cols], kb[:, cols], vb[:, cols]
            # contract the feature dim of both operands: Q @ K^T with no transpose
            scores = jax.lax.dot_general(
                qh, kh, (((1,), (1,)), ((), ())),
                preferred_element_type=jnp.float32) + bias
            m = jnp.max(scores, axis=-1, keepdims=True)
            e = jnp.exp(scores - m)
            s = jnp.sum(e, axis=-1, keepdims=True)
            r = pl.reciprocal(s, approx=True)
            r = r * (2.0 - s * r)          # one Newton step -> ~f32-exact softmax
            p = e * r
            # write head output straight into the scratch slab (no concatenate)
            attn_scr[rows, cols] = jnp.dot(p, vh, preferred_element_type=jnp.float32)

    attn_out = attn_scr[...]                                 # (B*L, D)

    # --- output projection + residual + LayerNorm (MHA sublayer) ---
    proj = jnp.dot(attn_out, wo_ref[...], preferred_element_type=jnp.float32) + bo_ref[...]
    y = _layernorm(proj + x, ln1g_ref[...], ln1b_ref[...])

    # --- FeedForward: Linear -> ReLU -> Linear, + residual + LayerNorm ---
    # (dropout p=0.0 in the reference module -> identity, omitted)
    hidden = jnp.maximum(
        jnp.dot(y, w1_ref[...], preferred_element_type=jnp.float32) + b1_ref[...], 0.0)
    ff = jnp.dot(hidden, w2_ref[...], preferred_element_type=jnp.float32) + b2_ref[...]
    out_ref[...] = _layernorm(ff + y, ln2g_ref[...], ln2b_ref[...]).astype(out_ref.dtype)


def encoder_layer(x, mask, params):
    """x: (B, L, D) f32, mask: (B, L, L) int32 (nonzero => masked)."""
    (wq, bq, wk, bk, wv, bv, wo, bo, ln1g, ln1b, w1, b1, w2, b2, ln2g, ln2b) = params

    inv_sqrt_dk = 1.0 / math.sqrt(DK)
    # One-time constant folding (weights only): fuse QKV and bake in 1/sqrt(dk).
    wqkv = jnp.concatenate([wq * inv_sqrt_dk, wk, wv], axis=1)   # (D, 3D)
    bqkv = jnp.concatenate([bq * inv_sqrt_dk, bk, bv], axis=1)   # (1, 3D)
    # Additive attention-mask bias: 0 where visible, -1e9 where masked.
    bias = jnp.where(mask > 0, -1e9, 0.0).astype(jnp.float32)    # (B, L, L)

    x2d = x.reshape(B * L, D)

    full = lambda shape: pl.BlockSpec(shape, lambda i: (0,) * len(shape))
    in_specs = [
        pl.BlockSpec((B * L, D), lambda i: (0, 0)),        # x, flattened rows
        pl.BlockSpec((B, L, L), lambda i: (0, 0, 0)),      # additive mask bias
        full((D, 3 * D)), full((1, 3 * D)),                # wqkv, bqkv
        full((D, D)), full((1, D)),                        # wo, bo
        full((1, D)), full((1, D)),                        # ln1 gamma/beta
        full((D, F)), full((1, F)),                        # w1, b1
        full((F, D)), full((1, D)),                        # w2, b2
        full((1, D)), full((1, D)),                        # ln2 gamma/beta
    ]
    grid_spec = pltpu.PrefetchScalarGridSpec(
        num_scalar_prefetch=0,
        grid=(1,),                                         # single step: no per-step
        in_specs=in_specs,                                 # pipeline overhead
        out_specs=pl.BlockSpec((B * L, D), lambda i: (0, 0)),
        scratch_shapes=[pltpu.VMEM((B * L, D), jnp.float32)],
    )
    out2d = pl.pallas_call(
        encoder_layer_kernel,
        out_shape=jax.ShapeDtypeStruct((B * L, D), jnp.float32),
        grid_spec=grid_spec,
        compiler_params=pltpu.CompilerParams(dimension_semantics=("arbitrary",)),
    )(x2d, bias, wqkv, bqkv, wo, bo, ln1g, ln1b, w1, b1, w2, b2, ln2g, ln2b)
    return out2d.reshape(B, L, D)


def reference(x, mask, params):
    (wq, bq, wk, bk, wv, bv, wo, bo, ln1g, ln1b, w1, b1, w2, b2, ln2g, ln2b) = params
    q = x @ wq + bq
    k = x @ wk + bk
    v = x @ wv + bv
    split = lambda t: t.reshape(B, L, H, DK).transpose(0, 2, 1, 3)
    qh, kh, vh = split(q), split(k), split(v)
    scores = jnp.einsum("bhqd,bhkd->bhqk", qh, kh) / math.sqrt(DK)
    scores = jnp.where(mask[:, None, :, :] > 0, -1e9, scores)
    p = jax.nn.softmax(scores, axis=-1)
    o = jnp.einsum("bhqk,bhkd->bhqd", p, vh).transpose(0, 2, 1, 3).reshape(B, L, D)
    proj = o @ wo + bo
    ln = lambda t, g, b_: (t - t.mean(-1, keepdims=True)) / jnp.sqrt(
        t.var(-1, keepdims=True) + EPS) * g + b_
    y = ln(proj + x, ln1g, ln1b)
    ff = jnp.maximum(y @ w1 + b1, 0.0) @ w2 + b2
    return ln(ff + y, ln2g, ln2b)


def init_params(key):
    ks = jax.random.split(key, 8)
    s = 0.05
    wq = jax.random.normal(ks[0], (D, D), jnp.float32) * s
    wk = jax.random.normal(ks[1], (D, D), jnp.float32) * s
    wv = jax.random.normal(ks[2], (D, D), jnp.float32) * s
    wo = jax.random.normal(ks[3], (D, D), jnp.float32) * s
    bq = jnp.full((1, D), 0.01, jnp.float32)
    bk = jnp.full((1, D), -0.01, jnp.float32)
    bv = jnp.full((1, D), 0.02, jnp.float32)
    bo = jnp.zeros((1, D), jnp.float32)
    ln1g = jnp.ones((1, D), jnp.float32)
    ln1b = jnp.zeros((1, D), jnp.float32)
    w1 = jax.random.normal(ks[4], (D, F), jnp.float32) * s
    b1 = jnp.full((1, F), 0.01, jnp.float32)
    w2 = jax.random.normal(ks[5], (F, D), jnp.float32) * s
    b2 = jnp.zeros((1, D), jnp.float32)
    ln2g = jnp.ones((1, D), jnp.float32)
    ln2b = jnp.zeros((1, D), jnp.float32)
    return (wq, bq, wk, bk, wv, bv, wo, bo, ln1g, ln1b,
            w1, b1, w2, b2, ln2g, ln2b)


if __name__ == "__main__":
    key = jax.random.PRNGKey(0)
    kx, kp = jax.random.split(key)
    x = jax.random.normal(kx, (B, L, D), jnp.float32)

    # self-attn mask: mask out the last 2 key positions of batch element 1
    key_pad = jnp.zeros((B, L), jnp.int32).at[1, L - 2:].set(1)
    mask = jnp.broadcast_to(key_pad[:, None, :], (B, L, L)).astype(jnp.int32)

    params = init_params(kp)

    out = encoder_layer(x, mask, params)
    out = jax.block_until_ready(out)

    ref = reference(x, mask, params)
    assert out.shape == (B, L, D)
    assert jnp.allclose(out, ref, atol=1e-4, rtol=1e-4), "mismatch vs reference"

    print("KERNEL_OK")
</pallas_src>

<mosaic_0001>
module attributes {stable_mosaic.version = 11 : i64} {
  func.func @encoder_layer_kernel(%arg0: i32, %arg1: memref<16x32xf32, #tpu.memory_space<vmem>>, %arg2: memref<2x8x8xf32, #tpu.memory_space<vmem>>, %arg3: memref<32x96xf32, #tpu.memory_space<vmem>>, %arg4: memref<1x96xf32, #tpu.memory_space<vmem>>, %arg5: memref<32x32xf32, #tpu.memory_space<vmem>>, %arg6: memref<1x32xf32, #tpu.memory_space<vmem>>, %arg7: memref<1x32xf32, #tpu.memory_space<vmem>>, %arg8: memref<1x32xf32, #tpu.memory_space<vmem>>, %arg9: memref<32x64xf32, #tpu.memory_space<vmem>>, %arg10: memref<1x64xf32, #tpu.memory_space<vmem>>, %arg11: memref<64x32xf32, #tpu.memory_space<vmem>>, %arg12: memref<1x32xf32, #tpu.memory_space<vmem>>, %arg13: memref<1x32xf32, #tpu.memory_space<vmem>>, %arg14: memref<1x32xf32, #tpu.memory_space<vmem>>, %arg15: memref<16x32xf32, #tpu.memory_space<vmem>>, %arg16: memref<16x32xf32, #tpu.memory_space<vmem>>) attributes {dimension_semantics = [#tpu.dimension_semantics<arbitrary>], iteration_bounds = array<i64: 1>, scalar_prefetch = 0 : i64, scratch_operands = 1 : i64, tpu.core_type = #tpu.core_type<tc>, window_params = [{pipeline_mode = #tpu.pipeline_mode<synchronous>, transform_indices = @transform_0, window_bounds = array<i64: 16, 32>}, {pipeline_mode = #tpu.pipeline_mode<synchronous>, transform_indices = @transform_1, window_bounds = array<i64: 2, 8, 8>}, {pipeline_mode = #tpu.pipeline_mode<synchronous>, transform_indices = @transform_2, window_bounds = array<i64: 32, 96>}, {pipeline_mode = #tpu.pipeline_mode<synchronous>, transform_indices = @transform_3, window_bounds = array<i64: 1, 96>}, {pipeline_mode = #tpu.pipeline_mode<synchronous>, transform_indices = @transform_4, window_bounds = array<i64: 32, 32>}, {pipeline_mode = #tpu.pipeline_mode<synchronous>, transform_indices = @transform_5, window_bounds = array<i64: 1, 32>}, {pipeline_mode = #tpu.pipeline_mode<synchronous>, transform_indices = @transform_6, window_bounds = array<i64: 1, 32>}, {pipeline_mode = #tpu.pipeline_mode<synchronous>, transform_indices = @transform_7, window_bounds = array<i64: 1, 32>}, {pipeline_mode = #tpu.pipeline_mode<synchronous>, transform_indices = @transform_8, window_bounds = array<i64: 32, 64>}, {pipeline_mode = #tpu.pipeline_mode<synchronous>, transform_indices = @transform_9, window_bounds = array<i64: 1, 64>}, {pipeline_mode = #tpu.pipeline_mode<synchronous>, transform_indices = @transform_10, window_bounds = array<i64: 64, 32>}, {pipeline_mode = #tpu.pipeline_mode<synchronous>, transform_indices = @transform_11, window_bounds = array<i64: 1, 32>}, {pipeline_mode = #tpu.pipeline_mode<synchronous>, transform_indices = @transform_12, window_bounds = array<i64: 1, 32>}, {pipeline_mode = #tpu.pipeline_mode<synchronous>, transform_indices = @transform_13, window_bounds = array<i64: 1, 32>}, {pipeline_mode = #tpu.pipeline_mode<synchronous>, transform_indices = @transform_14, window_bounds = array<i64: 16, 32>}]} {
    %c0 = arith.constant 0 : index
    %c0_0 = arith.constant 0 : index
    %0 = vector.load %arg1[%c0, %c0_0] : memref<16x32xf32, #tpu.memory_space<vmem>>, vector<16x32xf32>
    %c0_1 = arith.constant 0 : index
    %c0_2 = arith.constant 0 : index
    %1 = vector.load %arg3[%c0_1, %c0_2] : memref<32x96xf32, #tpu.memory_space<vmem>>, vector<32x96xf32>
    %cst = arith.constant dense<0.000000e+00> : vector<16x96xf32>
    %2 = tpu.matmul %0, %1, %cst {dimension_numbers = #tpu.dot_dimension_numbers<[1], [0], [0], [1], [0, 0, 1, 1], [], []>} : vector<16x32xf32>, vector<32x96xf32>, vector<16x96xf32> -> vector<16x96xf32>
    %c0_3 = arith.constant 0 : index
    %c0_4 = arith.constant 0 : index
    %3 = vector.load %arg4[%c0_3, %c0_4] : memref<1x96xf32, #tpu.memory_space<vmem>>, vector<1x96xf32>
    %4 = vector.broadcast %3 : vector<1x96xf32> to vector<16x96xf32>
    %5 = arith.addf %2, %4 : vector<16x96xf32>
    %6 = vector.extract_strided_slice %5 {offsets = [0, 0], sizes = [16, 32], strides = [1, 1]} : vector<16x96xf32> to vector<16x32xf32>
    %7 = vector.extract_strided_slice %5 {offsets = [0, 32], sizes = [16, 32], strides = [1, 1]} : vector<16x96xf32> to vector<16x32xf32>
    %8 = vector.extract_strided_slice %5 {offsets = [0, 64], sizes = [16, 32], strides = [1, 1]} : vector<16x96xf32> to vector<16x32xf32>
    %c0_5 = arith.constant 0 : index
    %c0_6 = arith.constant 0 : index
    %c0_7 = arith.constant 0 : index
    %9 = vector.load %arg2[%c0_5, %c0_6, %c0_7] : memref<2x8x8xf32, #tpu.memory_space<vmem>>, vector<1x8x8xf32>
    %10 = vector.shape_cast %9 : vector<1x8x8xf32> to vector<8x8xf32>
    %11 = vector.extract_strided_slice %6 {offsets = [0, 0], sizes = [8, 32], strides = [1, 1]} : vector<16x32xf32> to vector<8x32xf32>
    %12 = vector.extract_strided_slice %7 {offsets = [0, 0], sizes = [8, 32], strides = [1, 1]} : vector<16x32xf32> to vector<8x32xf32>
    %13 = vector.extract_strided_slice %8 {offsets = [0, 0], sizes = [8, 32], strides = [1, 1]} : vector<16x32xf32> to vector<8x32xf32>
    %14 = vector.extract_strided_slice %11 {offsets = [0, 0], sizes = [8, 8], strides = [1, 1]} : vector<8x32xf32> to vector<8x8xf32>
    %15 = vector.extract_strided_slice %12 {offsets = [0, 0], sizes = [8, 8], strides = [1, 1]} : vector<8x32xf32> to vector<8x8xf32>
    %16 = vector.extract_strided_slice %13 {offsets = [0, 0], sizes = [8, 8], strides = [1, 1]} : vector<8x32xf32> to vector<8x8xf32>
    %cst_8 = arith.constant dense<0.000000e+00> : vector<8x8xf32>
    %17 = tpu.matmul %14, %15, %cst_8 {dimension_numbers = #tpu.dot_dimension_numbers<[1], [1], [0], [0], [0, 0, 1, 0], [], []>} : vector<8x8xf32>, vector<8x8xf32>, vector<8x8xf32> -> vector<8x8xf32>
    %18 = arith.addf %17, %10 : vector<8x8xf32>
    %cst_9 = arith.constant dense<0xFF800000> : vector<8xf32>
    %19 = vector.multi_reduction <maximumf>, %18, %cst_9 [1] : vector<8x8xf32> to vector<8xf32>
    %20 = vector.shape_cast %19 : vector<8xf32> to vector<8x1xf32>
    %21 = vector.broadcast %20 : vector<8x1xf32> to vector<8x8xf32>
    %22 = arith.subf %18, %21 : vector<8x8xf32>
    %23 = math.exp %22 : vector<8x8xf32>
    %cst_10 = arith.constant dense<0.000000e+00> : vector<8xf32>
    %24 = vector.multi_reduction <add>, %23, %cst_10 [1] : vector<8x8xf32> to vector<8xf32>
    %25 = vector.shape_cast %24 : vector<8xf32> to vector<8x1xf32>
    %26 = tpu.reciprocal %25 {approx = true} : vector<8x1xf32> -> vector<8x1xf32>
    %27 = arith.mulf %25, %26 : vector<8x1xf32>
    %cst_11 = arith.constant 2.000000e+00 : f32
    %28 = vector.broadcast %cst_11 : f32 to vector<8x1xf32>
    %29 = arith.subf %28, %27 : vector<8x1xf32>
    %30 = arith.mulf %26, %29 : vector<8x1xf32>
    %31 = vector.broadcast %30 : vector<8x1xf32> to vector<8x8xf32>
    %32 = arith.mulf %23, %31 : vector<8x8xf32>
    %cst_12 = arith.constant dense<0.000000e+00> : vector<8x8xf32>
    %33 = tpu.matmul %32, %16, %cst_12 {dimension_numbers = #tpu.dot_dimension_numbers<[1], [0], [0], [1], [0, 0, 1, 1], [], []>} : vector<8x8xf32>, vector<8x8xf32>, vector<8x8xf32> -> vector<8x8xf32>
    %c0_13 = arith.constant 0 : index
    %c0_14 = arith.constant 0 : index
    %34 = vector.load %arg16[%c0_13, %c0_14] : memref<16x32xf32, #tpu.memory_space<vmem>>, vector<8x8xf32>
    tpu.vector_store %arg16[%c0_13, %c0_14], %33 {strides = array<i32>} : memref<16x32xf32, #tpu.memory_space<vmem>>, vector<8x8xf32>,
    %35 = vector.extract_strided_slice %11 {offsets = [0, 8], sizes = [8, 8], strides = [1, 1]} : vector<8x32xf32> to vector<8x8xf32>
    %36 = vector.extract_strided_slice %12 {offsets = [0, 8], sizes = [8, 8], strides = [1, 1]} : vector<8x32xf32> to vector<8x8xf32>
    %37 = vector.extract_strided_slice %13 {offsets = [0, 8], sizes = [8, 8], strides = [1, 1]} : vector<8x32xf32> to vector<8x8xf32>
    %cst_15 = arith.constant dense<0.000000e+00> : vector<8x8xf32>
    %38 = tpu.matmul %35, %36, %cst_15 {dimension_numbers = #tpu.dot_dimension_numbers<[1], [1], [0], [0], [0, 0, 1, 0], [], []>} : vector<8x8xf32>, vector<8x8xf32>, vector<8x8xf32> -> vector<8x8xf32>
    %39 = arith.addf %38, %10 : vector<8x8xf32>
    %cst_16 = arith.constant dense<0xFF800000> : vector<8xf32>
    %40 = vector.multi_reduction <maximumf>, %39, %cst_16 [1] : vector<8x8xf32> to vector<8xf32>
    %41 = vector.shape_cast %40 : vector<8xf32> to vector<8x1xf32>
    %42 = vector.broadcast %41 : vector<8x1xf32> to vector<8x8xf32>
    %43 = arith.subf %39, %42 : vector<8x8xf32>
    %44 = math.exp %43 : vector<8x8xf32>
    %cst_17 = arith.constant dense<0.000000e+00> : vector<8xf32>
    %45 = vector.multi_reduction <add>, %44, %cst_17 [1] : vector<8x8xf32> to vector<8xf32>
    %46 = vector.shape_cast %45 : vector<8xf32> to vector<8x1xf32>
    %47 = tpu.reciprocal %46 {approx = true} : vector<8x1xf32> -> vector<8x1xf32>
    %48 = arith.mulf %46, %47 : vector<8x1xf32>
    %cst_18 = arith.constant 2.000000e+00 : f32
    %49 = vector.broadcast %cst_18 : f32 to vector<8x1xf32>
    %50 = arith.subf %49, %48 : vector<8x1xf32>
    %51 = arith.mulf %47, %50 : vector<8x1xf32>
    %52 = vector.broadcast %51 : vector<8x1xf32> to vector<8x8xf32>
    %53 = arith.mulf %44, %52 : vector<8x8xf32>
    %cst_19 = arith.constant dense<0.000000e+00> : vector<8x8xf32>
    %54 = tpu.matmul %53, %37, %cst_19 {dimension_numbers = #tpu.dot_dimension_numbers<[1], [0], [0], [1], [0, 0, 1, 1], [], []>} : vector<8x8xf32>, vector<8x8xf32>, vector<8x8xf32> -> vector<8x8xf32>
    %c0_20 = arith.constant 0 : index
    %c8 = arith.constant 8 : index
    %55 = vector.load %arg16[%c0_20, %c8] : memref<16x32xf32, #tpu.memory_space<vmem>>, vector<8x8xf32>
    tpu.vector_store %arg16[%c0_20, %c8], %54 {strides = array<i32>} : memref<16x32xf32, #tpu.memory_space<vmem>>, vector<8x8xf32>,
    %56 = vector.extract_strided_slice %11 {offsets = [0, 16], sizes = [8, 8], strides = [1, 1]} : vector<8x32xf32> to vector<8x8xf32>
    %57 = vector.extract_strided_slice %12 {offsets = [0, 16], sizes = [8, 8], strides = [1, 1]} : vector<8x32xf32> to vector<8x8xf32>
    %58 = vector.extract_strided_slice %13 {offsets = [0, 16], sizes = [8, 8], strides = [1, 1]} : vector<8x32xf32> to vector<8x8xf32>
    %cst_21 = arith.constant dense<0.000000e+00> : vector<8x8xf32>
    %59 = tpu.matmul %56, %57, %cst_21 {dimension_numbers = #tpu.dot_dimension_numbers<[1], [1], [0], [0], [0, 0, 1, 0], [], []>} : vector<8x8xf32>, vector<8x8xf32>, vector<8x8xf32> -> vector<8x8xf32>
    %60 = arith.addf %59, %10 : vector<8x8xf32>
    %cst_22 = arith.constant dense<0xFF800000> : vector<8xf32>
    %61 = vector.multi_reduction <maximumf>, %60, %cst_22 [1] : vector<8x8xf32> to vector<8xf32>
    %62 = vector.shape_cast %61 : vector<8xf32> to vector<8x1xf32>
    %63 = vector.broadcast %62 : vector<8x1xf32> to vector<8x8xf32>
    %64 = arith.subf %60, %63 : vector<8x8xf32>
    %65 = math.exp %64 : vector<8x8xf32>
    %cst_23 = arith.constant dense<0.000000e+00> : vector<8xf32>
    %66 = vector.multi_reduction <add>, %65, %cst_23 [1] : vector<8x8xf32> to vector<8xf32>
    %67 = vector.shape_cast %66 : vector<8xf32> to vector<8x1xf32>
    %68 = tpu.reciprocal %67 {approx = true} : vector<8x1xf32> -> vector<8x1xf32>
    %69 = arith.mulf %67, %68 : vector<8x1xf32>
    %cst_24 = arith.constant 2.000000e+00 : f32
    %70 = vector.broadcast %cst_24 : f32 to vector<8x1xf32>
    %71 = arith.subf %70, %69 : vector<8x1xf32>
    %72 = arith.mulf %68, %71 : vector<8x1xf32>
    %73 = vector.broadcast %72 : vector<8x1xf32> to vector<8x8xf32>
    %74 = arith.mulf %65, %73 : vector<8x8xf32>
    %cst_25 = arith.constant dense<0.000000e+00> : vector<8x8xf32>
    %75 = tpu.matmul %74, %58, %cst_25 {dimension_numbers = #tpu.dot_dimension_numbers<[1], [0], [0], [1], [0, 0, 1, 1], [], []>} : vector<8x8xf32>, vector<8x8xf32>, vector<8x8xf32> -> vector<8x8xf32>
    %c0_26 = arith.constant 0 : index
    %c16 = arith.constant 16 : index
    %76 = vector.load %arg16[%c0_26, %c16] : memref<16x32xf32, #tpu.memory_space<vmem>>, vector<8x8xf32>
    tpu.vector_store %arg16[%c0_26, %c16], %75 {strides = array<i32>} : memref<16x32xf32, #tpu.memory_space<vmem>>, vector<8x8xf32>,
    %77 = vector.extract_strided_slice %11 {offsets = [0, 24], sizes = [8, 8], strides = [1, 1]} : vector<8x32xf32> to vector<8x8xf32>
    %78 = vector.extract_strided_slice %12 {offsets = [0, 24], sizes = [8, 8], strides = [1, 1]} : vector<8x32xf32> to vector<8x8xf32>
    %79 = vector.extract_strided_slice %13 {offsets = [0, 24], sizes = [8, 8], strides = [1, 1]} : vector<8x32xf32> to vector<8x8xf32>
    %cst_27 = arith.constant dense<0.000000e+00> : vector<8x8xf32>
    %80 = tpu.matmul %77, %78, %cst_27 {dimension_numbers = #tpu.dot_dimension_numbers<[1], [1], [0], [0], [0, 0, 1, 0], [], []>} : vector<8x8xf32>, vector<8x8xf32>, vector<8x8xf32> -> vector<8x8xf32>
    %81 = arith.addf %80, %10 : vector<8x8xf32>
    %cst_28 = arith.constant dense<0xFF800000> : vector<8xf32>
    %82 = vector.multi_reduction <maximumf>, %81, %cst_28 [1] : vector<8x8xf32> to vector<8xf32>
    %83 = vector.shape_cast %82 : vector<8xf32> to vector<8x1xf32>
    %84 = vector.broadcast %83 : vector<8x1xf32> to vector<8x8xf32>
    %85 = arith.subf %81, %84 : vector<8x8xf32>
    %86 = math.exp %85 : vector<8x8xf32>
    %cst_29 = arith.constant dense<0.000000e+00> : vector<8xf32>
    %87 = vector.multi_reduction <add>, %86, %cst_29 [1] : vector<8x8xf32> to vector<8xf32>
    %88 = vector.shape_cast %87 : vector<8xf32> to vector<8x1xf32>
    %89 = tpu.reciprocal %88 {approx = true} : vector<8x1xf32> -> vector<8x1xf32>
    %90 = arith.mulf %88, %89 : vector<8x1xf32>
    %cst_30 = arith.constant 2.000000e+00 : f32
    %91 = vector.broadcast %cst_30 : f32 to vector<8x1xf32>
    %92 = arith.subf %91, %90 : vector<8x1xf32>
    %93 = arith.mulf %89, %92 : vector<8x1xf32>
    %94 = vector.broadcast %93 : vector<8x1xf32> to vector<8x8xf32>
    %95 = arith.mulf %86, %94 : vector<8x8xf32>
    %cst_31 = arith.constant dense<0.000000e+00> : vector<8x8xf32>
    %96 = tpu.matmul %95, %79, %cst_31 {dimension_numbers = #tpu.dot_dimension_numbers<[1], [0], [0], [1], [0, 0, 1, 1], [], []>} : vector<8x8xf32>, vector<8x8xf32>, vector<8x8xf32> -> vector<8x8xf32>
    %c0_32 = arith.constant 0 : index
    %c24 = arith.constant 24 : index
    %97 = vector.load %arg16[%c0_32, %c24] : memref<16x32xf32, #tpu.memory_space<vmem>>, vector<8x8xf32>
    tpu.vector_store %arg16[%c0_32, %c24], %96 {strides = array<i32>} : memref<16x32xf32, #tpu.memory_space<vmem>>, vector<8x8xf32>,
    %c1 = arith.constant 1 : index
    %c0_33 = arith.constant 0 : index
    %c0_34 = arith.constant 0 : index
    %98 = vector.load %arg2[%c1, %c0_33, %c0_34] : memref<2x8x8xf32, #tpu.memory_space<vmem>>, vector<1x8x8xf32>
    %99 = vector.shape_cast %98 : vector<1x8x8xf32> to vector<8x8xf32>
    %100 = vector.extract_strided_slice %6 {offsets = [8, 0], sizes = [8, 32], strides = [1, 1]} : vector<16x32xf32> to vector<8x32xf32>
    %101 = vector.extract_strided_slice %7 {offsets = [8, 0], sizes = [8, 32], strides = [1, 1]} : vector<16x32xf32> to vector<8x32xf32>
    %102 = vector.extract_strided_slice %8 {offsets = [8, 0], sizes = [8, 32], strides = [1, 1]} : vector<16x32xf32> to vector<8x32xf32>
    %103 = vector.extract_strided_slice %100 {offsets = [0, 0], sizes = [8, 8], strides = [1, 1]} : vector<8x32xf32> to vector<8x8xf32>
    %104 = vector.extract_strided_slice %101 {offsets = [0, 0], sizes = [8, 8], strides = [1, 1]} : vector<8x32xf32> to vector<8x8xf32>
    %105 = vector.extract_strided_slice %102 {offsets = [0, 0], sizes = [8, 8], strides = [1, 1]} : vector<8x32xf32> to vector<8x8xf32>
    %cst_35 = arith.constant dense<0.000000e+00> : vector<8x8xf32>
    %106 = tpu.matmul %103, %104, %cst_35 {dimension_numbers = #tpu.dot_dimension_numbers<[1], [1], [0], [0], [0, 0, 1, 0], [], []>} : vector<8x8xf32>, vector<8x8xf32>, vector<8x8xf32> -> vector<8x8xf32>
    %107 = arith.addf %106, %99 : vector<8x8xf32>
    %cst_36 = arith.constant dense<0xFF800000> : vector<8xf32>
    %108 = vector.multi_reduction <maximumf>, %107, %cst_36 [1] : vector<8x8xf32> to vector<8xf32>
    %109 = vector.shape_cast %108 : vector<8xf32> to vector<8x1xf32>
    %110 = vector.broadcast %109 : vector<8x1xf32> to vector<8x8xf32>
    %111 = arith.subf %107, %110 : vector<8x8xf32>
    %112 = math.exp %111 : vector<8x8xf32>
    %cst_37 = arith.constant dense<0.000000e+00> : vector<8xf32>
    %113 = vector.multi_reduction <add>, %112, %cst_37 [1] : vector<8x8xf32> to vector<8xf32>
    %114 = vector.shape_cast %113 : vector<8xf32> to vector<8x1xf32>
    %115 = tpu.reciprocal %114 {approx = true} : vector<8x1xf32> -> vector<8x1xf32>
    %116 = arith.mulf %114, %115 : vector<8x1xf32>
    %cst_38 = arith.constant 2.000000e+00 : f32
    %117 = vector.broadcast %cst_38 : f32 to vector<8x1xf32>
    %118 = arith.subf %117, %116 : vector<8x1xf32>
    %119 = arith.mulf %115, %118 : vector<8x1xf32>
    %120 = vector.broadcast %119 : vector<8x1xf32> to vector<8x8xf32>
    %121 = arith.mulf %112, %120 : vector<8x8xf32>
    %cst_39 = arith.constant dense<0.000000e+00> : vector<8x8xf32>
    %122 = tpu.matmul %121, %105, %cst_39 {dimension_numbers = #tpu.dot_dimension_numbers<[1], [0], [0], [1], [0, 0, 1, 1], [], []>} : vector<8x8xf32>, vector<8x8xf32>, vector<8x8xf32> -> vector<8x8xf32>
    %c8_40 = arith.constant 8 : index
    %c0_41 = arith.constant 0 : index
    %123 = vector.load %arg16[%c8_40, %c0_41] : memref<16x32xf32, #tpu.memory_space<vmem>>, vector<8x8xf32>
    tpu.vector_store %arg16[%c8_40, %c0_41], %122 {strides = array<i32>} : memref<16x32xf32, #tpu.memory_space<vmem>>, vector<8x8xf32>,
    %124 = vector.extract_strided_slice %100 {offsets = [0, 8], sizes = [8, 8], strides = [1, 1]} : vector<8x32xf32> to vector<8x8xf32>
    %125 = vector.extract_strided_slice %101 {offsets = [0, 8], sizes = [8, 8], strides = [1, 1]} : vector<8x32xf32> to vector<8x8xf32>
    %126 = vector.extract_strided_slice %102 {offsets = [0, 8], sizes = [8, 8], strides = [1, 1]} : vector<8x32xf32> to vector<8x8xf32>
    %cst_42 = arith.constant dense<0.000000e+00> : vector<8x8xf32>
    %127 = tpu.matmul %124, %125, %cst_42 {dimension_numbers = #tpu.dot_dimension_numbers<[1], [1], [0], [0], [0, 0, 1, 0], [], []>} : vector<8x8xf32>, vector<8x8xf32>, vector<8x8xf32> -> vector<8x8xf32>
    %128 = arith.addf %127, %99 : vector<8x8xf32>
    %cst_43 = arith.constant dense<0xFF800000> : vector<8xf32>
    %129 = vector.multi_reduction <maximumf>, %128, %cst_43 [1] : vector<8x8xf32> to vector<8xf32>
    %130 = vector.shape_cast %129 : vector<8xf32> to vector<8x1xf32>
    %131 = vector.broadcast %130 : vector<8x1xf32> to vector<8x8xf32>
    %132 = arith.subf %128, %131 : vector<8x8xf32>
    %133 = math.exp %132 : vector<8x8xf32>
    %cst_44 = arith.constant dense<0.000000e+00> : vector<8xf32>
    %134 = vector.multi_reduction <add>, %133, %cst_44 [1] : vector<8x8xf32> to vector<8xf32>
    %135 = vector.shape_cast %134 : vector<8xf32> to vector<8x1xf32>
    %136 = tpu.reciprocal %135 {approx = true} : vector<8x1xf32> -> vector<8x1xf32>
    %137 = arith.mulf %135, %136 : vector<8x1xf32>
    %cst_45 = arith.constant 2.000000e+00 : f32
    %138 = vector.broadcast %cst_45 : f32 to vector<8x1xf32>
    %139 = arith.subf %138, %137 : vector<8x1xf32>
    %140 = arith.mulf %136, %139 : vector<8x1xf32>
    %141 = vector.broadcast %140 : vector<8x1xf32> to vector<8x8xf32>
    %142 = arith.mulf %133, %141 : vector<8x8xf32>
    %cst_46 = arith.constant dense<0.000000e+00> : vector<8x8xf32>
    %143 = tpu.matmul %142, %126, %cst_46 {dimension_numbers = #tpu.dot_dimension_numbers<[1], [0], [0], [1], [0, 0, 1, 1], [], []>} : vector<8x8xf32>, vector<8x8xf32>, vector<8x8xf32> -> vector<8x8xf32>
    %c8_47 = arith.constant 8 : index
    %c8_48 = arith.constant 8 : index
    %144 = vector.load %arg16[%c8_47, %c8_48] : memref<16x32xf32, #tpu.memory_space<vmem>>, vector<8x8xf32>
    tpu.vector_store %arg16[%c8_47, %c8_48], %143 {strides = array<i32>} : memref<16x32xf32, #tpu.memory_space<vmem>>, vector<8x8xf32>,
    %145 = vector.extract_strided_slice %100 {offsets = [0, 16], sizes = [8, 8], strides = [1, 1]} : vector<8x32xf32> to vector<8x8xf32>
    %146 = vector.extract_strided_slice %101 {offsets = [0, 16], sizes = [8, 8], strides = [1, 1]} : vector<8x32xf32> to vector<8x8xf32>
    %147 = vector.extract_strided_slice %102 {offsets = [0, 16], sizes = [8, 8], strides = [1, 1]} : vector<8x32xf32> to vector<8x8xf32>
    %cst_49 = arith.constant dense<0.000000e+00> : vector<8x8xf32>
    %148 = tpu.matmul %145, %146, %cst_49 {dimension_numbers = #tpu.dot_dimension_numbers<[1], [1], [0], [0], [0, 0, 1, 0], [], []>} : vector<8x8xf32>, vector<8x8xf32>, vector<8x8xf32> -> vector<8x8xf32>
    %149 = arith.addf %148, %99 : vector<8x8xf32>
    %cst_50 = arith.constant dense<0xFF800000> : vector<8xf32>
    %150 = vector.multi_reduction <maximumf>, %149, %cst_50 [1] : vector<8x8xf32> to vector<8xf32>
    %151 = vector.shape_cast %150 : vector<8xf32> to vector<8x1xf32>
    %152 = vector.broadcast %151 : vector<8x1xf32> to vector<8x8xf32>
    %153 = arith.subf %149, %152 : vector<8x8xf32>
    %154 = math.exp %153 : vector<8x8xf32>
    %cst_51 = arith.constant dense<0.000000e+00> : vector<8xf32>
    %155 = vector.multi_reduction <add>, %154, %cst_51 [1] : vector<8x8xf32> to vector<8xf32>
    %156 = vector.shape_cast %155 : vector<8xf32> to vector<8x1xf32>
    %157 = tpu.reciprocal %156 {approx = true} : vector<8x1xf32> -> vector<8x1xf32>
    %158 = arith.mulf %156, %157 : vector<8x1xf32>
    %cst_52 = arith.constant 2.000000e+00 : f32
    %159 = vector.broadcast %cst_52 : f32 to vector<8x1xf32>
    %160 = arith.subf %159, %158 : vector<8x1xf32>
    %161 = arith.mulf %157, %160 : vector<8x1xf32>
    %162 = vector.broadcast %161 : vector<8x1xf32> to vector<8x8xf32>
    %163 = arith.mulf %154, %162 : vector<8x8xf32>
    %cst_53 = arith.constant dense<0.000000e+00> : vector<8x8xf32>
    %164 = tpu.matmul %163, %147, %cst_53 {dimension_numbers = #tpu.dot_dimension_numbers<[1], [0], [0], [1], [0, 0, 1, 1], [], []>} : vector<8x8xf32>, vector<8x8xf32>, vector<8x8xf32> -> vector<8x8xf32>
    %c8_54 = arith.constant 8 : index
    %c16_55 = arith.constant 16 : index
    %165 = vector.load %arg16[%c8_54, %c16_55] : memref<16x32xf32, #tpu.memory_space<vmem>>, vector<8x8xf32>
    tpu.vector_store %arg16[%c8_54, %c16_55], %164 {strides = array<i32>} : memref<16x32xf32, #tpu.memory_space<vmem>>, vector<8x8xf32>,
    %166 = vector.extract_strided_slice %100 {offsets = [0, 24], sizes = [8, 8], strides = [1, 1]} : vector<8x32xf32> to vector<8x8xf32>
    %167 = vector.extract_strided_slice %101 {offsets = [0, 24], sizes = [8, 8], strides = [1, 1]} : vector<8x32xf32> to vector<8x8xf32>
    %168 = vector.extract_strided_slice %102 {offsets = [0, 24], sizes = [8, 8], strides = [1, 1]} : vector<8x32xf32> to vector<8x8xf32>
    %cst_56 = arith.constant dense<0.000000e+00> : vector<8x8xf32>
    %169 = tpu.matmul %166, %167, %cst_56 {dimension_numbers = #tpu.dot_dimension_numbers<[1], [1], [0], [0], [0, 0, 1, 0], [], []>} : vector<8x8xf32>, vector<8x8xf32>, vector<8x8xf32> -> vector<8x8xf32>
    %170 = arith.addf %169, %99 : vector<8x8xf32>
    %cst_57 = arith.constant dense<0xFF800000> : vector<8xf32>
    %171 = vector.multi_reduction <maximumf>, %170, %cst_57 [1] : vector<8x8xf32> to vector<8xf32>
    %172 = vector.shape_cast %171 : vector<8xf32> to vector<8x1xf32>
    %173 = vector.broadcast %172 : vector<8x1xf32> to vector<8x8xf32>
    %174 = arith.subf %170, %173 : vector<8x8xf32>
    %175 = math.exp %174 : vector<8x8xf32>
    %cst_58 = arith.constant dense<0.000000e+00> : vector<8xf32>
    %176 = vector.multi_reduction <add>, %175, %cst_58 [1] : vector<8x8xf32> to vector<8xf32>
    %177 = vector.shape_cast %176 : vector<8xf32> to vector<8x1xf32>
    %178 = tpu.reciprocal %177 {approx = true} : vector<8x1xf32> -> vector<8x1xf32>
    %179 = arith.mulf %177, %178 : vector<8x1xf32>
    %cst_59 = arith.constant 2.000000e+00 : f32
    %180 = vector.broadcast %cst_59 : f32 to vector<8x1xf32>
    %181 = arith.subf %180, %179 : vector<8x1xf32>
    %182 = arith.mulf %178, %181 : vector<8x1xf32>
    %183 = vector.broadcast %182 : vector<8x1xf32> to vector<8x8xf32>
    %184 = arith.mulf %175, %183 : vector<8x8xf32>
    %cst_60 = arith.constant dense<0.000000e+00> : vector<8x8xf32>
    %185 = tpu.matmul %184, %168, %cst_60 {dimension_numbers = #tpu.dot_dimension_numbers<[1], [0], [0], [1], [0, 0, 1, 1], [], []>} : vector<8x8xf32>, vector<8x8xf32>, vector<8x8xf32> -> vector<8x8xf32>
    %c8_61 = arith.constant 8 : index
    %c24_62 = arith.constant 24 : index
    %186 = vector.load %arg16[%c8_61, %c24_62] : memref<16x32xf32, #tpu.memory_space<vmem>>, vector<8x8xf32>
    tpu.vector_store %arg16[%c8_61, %c24_62], %185 {strides = array<i32>} : memref<16x32xf32, #tpu.memory_space<vmem>>, vector<8x8xf32>,
    %c0_63 = arith.constant 0 : index
    %c0_64 = arith.constant 0 : index
    %187 = vector.load %arg16[%c0_63, %c0_64] : memref<16x32xf32, #tpu.memory_space<vmem>>, vector<16x32xf32>
    %c0_65 = arith.constant 0 : index
    %c0_66 = arith.constant 0 : index
    %188 = vector.load %arg5[%c0_65, %c0_66] : memref<32x32xf32, #tpu.memory_space<vmem>>, vector<32x32xf32>
    %cst_67 = arith.constant dense<0.000000e+00> : vector<16x32xf32>
    %189 = tpu.matmul %187, %188, %cst_67 {dimension_numbers = #tpu.dot_dimension_numbers<[1], [0], [0], [1], [0, 0, 1, 1], [], []>} : vector<16x32xf32>, vector<32x32xf32>, vector<16x32xf32> -> vector<16x32xf32>
    %c0_68 = arith.constant 0 : index
    %c0_69 = arith.constant 0 : index
    %190 = vector.load %arg6[%c0_68, %c0_69] : memref<1x32xf32, #tpu.memory_space<vmem>>, vector<1x32xf32>
    %191 = vector.broadcast %190 : vector<1x32xf32> to vector<16x32xf32>
    %192 = arith.addf %189, %191 : vector<16x32xf32>
    %193 = arith.addf %192, %0 : vector<16x32xf32>
    %c0_70 = arith.constant 0 : index
    %c0_71 = arith.constant 0 : index
    %194 = vector.load %arg7[%c0_70, %c0_71] : memref<1x32xf32, #tpu.memory_space<vmem>>, vector<1x32xf32>
    %c0_72 = arith.constant 0 : index
    %c0_73 = arith.constant 0 : index
    %195 = vector.load %arg8[%c0_72, %c0_73] : memref<1x32xf32, #tpu.memory_space<vmem>>, vector<1x32xf32>
    %cst_74 = arith.constant dense<0.000000e+00> : vector<16xf32>
    %196 = vector.multi_reduction <add>, %193, %cst_74 [1] : vector<16x32xf32> to vector<16xf32>
    %197 = vector.shape_cast %196 : vector<16xf32> to vector<16x1xf32>
    %cst_75 = arith.constant 3.200000e+01 : f32
    %198 = vector.broadcast %cst_75 : f32 to vector<16x1xf32>
    %199 = arith.divf %197, %198 : vector<16x1xf32>
    %200 = vector.broadcast %199 : vector<16x1xf32> to vector<16x32xf32>
    %201 = arith.subf %193, %200 : vector<16x32xf32>
    %202 = arith.mulf %201, %201 : vector<16x32xf32>
    %cst_76 = arith.constant dense<0.000000e+00> : vector<16xf32>
    %203 = vector.multi_reduction <add>, %202, %cst_76 [1] : vector<16x32xf32> to vector<16xf32>
    %204 = vector.shape_cast %203 : vector<16xf32> to vector<16x1xf32>
    %cst_77 = arith.constant 3.200000e+01 : f32
    %205 = vector.broadcast %cst_77 : f32 to vector<16x1xf32>
    %206 = arith.divf %204, %205 : vector<16x1xf32>
    %207 = vector.broadcast %199 : vector<16x1xf32> to vector<16x32xf32>
    %208 = arith.subf %193, %207 : vector<16x32xf32>
    %cst_78 = arith.constant 9.99999974E-6 : f32
    %209 = vector.broadcast %cst_78 : f32 to vector<16x1xf32>
    %210 = arith.addf %206, %209 : vector<16x1xf32>
    %211 = math.rsqrt %210 : vector<16x1xf32>
    %212 = vector.broadcast %211 : vector<16x1xf32> to vector<16x32xf32>
    %213 = arith.mulf %208, %212 : vector<16x32xf32>
    %214 = vector.broadcast %194 : vector<1x32xf32> to vector<16x32xf32>
    %215 = arith.mulf %213, %214 : vector<16x32xf32>
    %216 = vector.broadcast %195 : vector<1x32xf32> to vector<16x32xf32>
    %217 = arith.addf %215, %216 : vector<16x32xf32>
    %c0_79 = arith.constant 0 : index
    %c0_80 = arith.constant 0 : index
    %218 = vector.load %arg9[%c0_79, %c0_80] : memref<32x64xf32, #tpu.memory_space<vmem>>, vector<32x64xf32>
    %cst_81 = arith.constant dense<0.000000e+00> : vector<16x64xf32>
    %219 = tpu.matmul %217, %218, %cst_81 {dimension_numbers = #tpu.dot_dimension_numbers<[1], [0], [0], [1], [0, 0, 1, 1], [], []>} : vector<16x32xf32>, vector<32x64xf32>, vector<16x64xf32> -> vector<16x64xf32>
    %c0_82 = arith.constant 0 : index
    %c0_83 = arith.constant 0 : index
    %220 = vector.load %arg10[%c0_82, %c0_83] : memref<1x64xf32, #tpu.memory_space<vmem>>, vector<1x64xf32>
    %221 = vector.broadcast %220 : vector<1x64xf32> to vector<16x64xf32>
    %222 = arith.addf %219, %221 : vector<16x64xf32>
    %cst_84 = arith.constant 0.000000e+00 : f32
    %223 = vector.broadcast %cst_84 : f32 to vector<16x64xf32>
    %224 = arith.maximumf %222, %223 : vector<16x64xf32>
    %c0_85 = arith.constant 0 : index
    %c0_86 = arith.constant 0 : index
    %225 = vector.load %arg11[%c0_85, %c0_86] : memref<64x32xf32, #tpu.memory_space<vmem>>, vector<64x32xf32>
    %cst_87 = arith.constant dense<0.000000e+00> : vector<16x32xf32>
    %226 = tpu.matmul %224, %225, %cst_87 {dimension_numbers = #tpu.dot_dimension_numbers<[1], [0], [0], [1], [0, 0, 1, 1], [], []>} : vector<16x64xf32>, vector<64x32xf32>, vector<16x32xf32> -> vector<16x32xf32>
    %c0_88 = arith.constant 0 : index
    %c0_89 = arith.constant 0 : index
    %227 = vector.load %arg12[%c0_88, %c0_89] : memref<1x32xf32, #tpu.memory_space<vmem>>, vector<1x32xf32>
    %228 = vector.broadcast %227 : vector<1x32xf32> to vector<16x32xf32>
    %229 = arith.addf %226, %228 : vector<16x32xf32>
    %230 = arith.addf %229, %217 : vector<16x32xf32>
    %c0_90 = arith.constant 0 : index
    %c0_91 = arith.constant 0 : index
    %231 = vector.load %arg13[%c0_90, %c0_91] : memref<1x32xf32, #tpu.memory_space<vmem>>, vector<1x32xf32>
    %c0_92 = arith.constant 0 : index
    %c0_93 = arith.constant 0 : index
    %232 = vector.load %arg14[%c0_92, %c0_93] : memref<1x32xf32, #tpu.memory_space<vmem>>, vector<1x32xf32>
    %cst_94 = arith.constant dense<0.000000e+00> : vector<16xf32>
    %233 = vector.multi_reduction <add>, %230, %cst_94 [1] : vector<16x32xf32> to vector<16xf32>
    %234 = vector.shape_cast %233 : vector<16xf32> to vector<16x1xf32>
    %cst_95 = arith.constant 3.200000e+01 : f32
    %235 = vector.broadcast %cst_95 : f32 to vector<16x1xf32>
    %236 = arith.divf %234, %235 : vector<16x1xf32>
    %237 = vector.broadcast %236 : vector<16x1xf32> to vector<16x32xf32>
    %238 = arith.subf %230, %237 : vector<16x32xf32>
    %239 = arith.mulf %238, %238 : vector<16x32xf32>
    %cst_96 = arith.constant dense<0.000000e+00> : vector<16xf32>
    %240 = vector.multi_reduction <add>, %239, %cst_96 [1] : vector<16x32xf32> to vector<16xf32>
    %241 = vector.shape_cast %240 : vector<16xf32> to vector<16x1xf32>
    %cst_97 = arith.constant 3.200000e+01 : f32
    %242 = vector.broadcast %cst_97 : f32 to vector<16x1xf32>
    %243 = arith.divf %241, %242 : vector<16x1xf32>
    %244 = vector.broadcast %236 : vector<16x1xf32> to vector<16x32xf32>
    %245 = arith.subf %230, %244 : vector<16x32xf32>
    %cst_98 = arith.constant 9.99999974E-6 : f32
    %246 = vector.broadcast %cst_98 : f32 to vector<16x1xf32>
    %247 = arith.addf %243, %246 : vector<16x1xf32>
    %248 = math.rsqrt %247 : vector<16x1xf32>
    %249 = vector.broadcast %248 : vector<16x1xf32> to vector<16x32xf32>
    %250 = arith.mulf %245, %249 : vector<16x32xf32>
    %251 = vector.broadcast %231 : vector<1x32xf32> to vector<16x32xf32>
    %252 = arith.mulf %250, %251 : vector<16x32xf32>
    %253 = vector.broadcast %232 : vector<1x32xf32> to vector<16x32xf32>
    %254 = arith.addf %252, %253 : vector<16x32xf32>
    %c0_99 = arith.constant 0 : index
    %c0_100 = arith.constant 0 : index
    %255 = vector.load %arg15[%c0_99, %c0_100] : memref<16x32xf32, #tpu.memory_space<vmem>>, vector<16x32xf32>
    tpu.vector_store %arg15[%c0_99, %c0_100], %254 {strides = array<i32>} : memref<16x32xf32, #tpu.memory_space<vmem>>, vector<16x32xf32>,
    return
  }
  func.func @transform_0(%arg0: i32) -> (i32, i32) {
    %c0_i32 = arith.constant 0 : i32
    %c0_i32_0 = arith.constant 0 : i32
    %c0_i32_1 = arith.constant 0 : i32
    return %c0_i32, %c0_i32_0 : i32, i32
  }
  func.func @transform_1(%arg0: i32) -> (i32, i32, i32) {
    %c0_i32 = arith.constant 0 : i32
    %c0_i32_0 = arith.constant 0 : i32
    %c0_i32_1 = arith.constant 0 : i32
    %c0_i32_2 = arith.constant 0 : i32
    return %c0_i32, %c0_i32_0, %c0_i32_1 : i32, i32, i32
  }
  func.func @transform_2(%arg0: i32) -> (i32, i32) {
    %c0_i32 = arith.constant 0 : i32
    %c0_i32_0 = arith.constant 0 : i32
    %c0_i32_1 = arith.constant 0 : i32
    return %c0_i32, %c0_i32_0 : i32, i32
  }
  func.func @transform_3(%arg0: i32) -> (i32, i32) {
    %c0_i32 = arith.constant 0 : i32
    %c0_i32_0 = arith.constant 0 : i32
    %c0_i32_1 = arith.constant 0 : i32
    return %c0_i32, %c0_i32_0 : i32, i32
  }
  func.func @transform_4(%arg0: i32) -> (i32, i32) {
    %c0_i32 = arith.constant 0 : i32
    %c0_i32_0 = arith.constant 0 : i32
    %c0_i32_1 = arith.constant 0 : i32
    return %c0_i32, %c0_i32_0 : i32, i32
  }
  func.func @transform_5(%arg0: i32) -> (i32, i32) {
    %c0_i32 = arith.constant 0 : i32
    %c0_i32_0 = arith.constant 0 : i32
    %c0_i32_1 = arith.constant 0 : i32
    return %c0_i32, %c0_i32_0 : i32, i32
  }
  func.func @transform_6(%arg0: i32) -> (i32, i32) {
    %c0_i32 = arith.constant 0 : i32
    %c0_i32_0 = arith.constant 0 : i32
    %c0_i32_1 = arith.constant 0 : i32
    return %c0_i32, %c0_i32_0 : i32, i32
  }
  func.func @transform_7(%arg0: i32) -> (i32, i32) {
    %c0_i32 = arith.constant 0 : i32
    %c0_i32_0 = arith.constant 0 : i32
    %c0_i32_1 = arith.constant 0 : i32
    return %c0_i32, %c0_i32_0 : i32, i32
  }
  func.func @transform_8(%arg0: i32) -> (i32, i32) {
    %c0_i32 = arith.constant 0 : i32
    %c0_i32_0 = arith.constant 0 : i32
    %c0_i32_1 = arith.constant 0 : i32
    return %c0_i32, %c0_i32_0 : i32, i32
  }
  func.func @transform_9(%arg0: i32) -> (i32, i32) {
    %c0_i32 = arith.constant 0 : i32
    %c0_i32_0 = arith.constant 0 : i32
    %c0_i32_1 = arith.constant 0 : i32
    return %c0_i32, %c0_i32_0 : i32, i32
  }
  func.func @transform_10(%arg0: i32) -> (i32, i32) {
    %c0_i32 = arith.constant 0 : i32
    %c0_i32_0 = arith.constant 0 : i32
    %c0_i32_1 = arith.constant 0 : i32
    return %c0_i32, %c0_i32_0 : i32, i32
  }
  func.func @transform_11(%arg0: i32) -> (i32, i32) {
    %c0_i32 = arith.constant 0 : i32
    %c0_i32_0 = arith.constant 0 : i32
    %c0_i32_1 = arith.constant 0 : i32
    return %c0_i32, %c0_i32_0 : i32, i32
  }
  func.func @transform_12(%arg0: i32) -> (i32, i32) {
    %c0_i32 = arith.constant 0 : i32
    %c0_i32_0 = arith.constant 0 : i32
    %c0_i32_1 = arith.constant 0 : i32
    return %c0_i32, %c0_i32_0 : i32, i32
  }
  func.func @transform_13(%arg0: i32) -> (i32, i32) {
    %c0_i32 = arith.constant 0 : i32
    %c0_i32_0 = arith.constant 0 : i32
    %c0_i32_1 = arith.constant 0 : i32
    return %c0_i32, %c0_i32_0 : i32, i32
  }
  func.func @transform_14(%arg0: i32) -> (i32, i32) {
    %c0_i32 = arith.constant 0 : i32
    %c0_i32_0 = arith.constant 0 : i32
    %c0_i32_1 = arith.constant 0 : i32
    return %c0_i32, %c0_i32_0 : i32, i32
  }
}

</mosaic_0001>

<llo_original>
// kernel: tpu_custom_call.1
$region0: #{tpu_custom_call.1}
  #allocation0 [shape = 'u32[]', space=smem, size = 0x4, offset = 0x4, fixed_abs, tag = 'smem constant byte address 0x4 - core index']
  #allocation1 [shape = 'u32[144,128]{1,0:T(1,128)}', space=vmem, size = 0x12000, scoped, tag = 'internal scratch']
  #allocation2 [shape = 'f32[16,32]{1,0:T(8,128)}', space=vmem, size = 0x2000, scoped, tag = 'scratch operand']
  %s0 = inlined_call_operand.hbm [shape: f32[16,32], index: 0, kind: input, shape index: {}]
  %s1 = inlined_call_operand.hbm [shape: f32[2,8,8], index: 1, kind: input, shape index: {}]
  %s2 = inlined_call_operand.vmem [shape: f32[32,96], index: 2, kind: input, shape index: {}]
  %s3 = inlined_call_operand.vmem [shape: f32[1,96], index: 3, kind: input, shape index: {}]
  %s4 = inlined_call_operand.vmem [shape: f32[32,32], index: 4, kind: input, shape index: {}]
  %s5 = inlined_call_operand.vmem [shape: f32[1,32], index: 5, kind: input, shape index: {}]
  %s6 = inlined_call_operand.vmem [shape: f32[1,32], index: 6, kind: input, shape index: {}]
  %s7 = inlined_call_operand.vmem [shape: f32[1,32], index: 7, kind: input, shape index: {}]
  %s8 = inlined_call_operand.vmem [shape: f32[32,64], index: 8, kind: input, shape index: {}]
  %s9 = inlined_call_operand.vmem [shape: f32[1,64], index: 9, kind: input, shape index: {}]
  %s10 = inlined_call_operand.vmem [shape: f32[64,32], index: 10, kind: input, shape index: {}]
  %s11 = inlined_call_operand.vmem [shape: f32[1,32], index: 11, kind: input, shape index: {}]
  %s12 = inlined_call_operand.vmem [shape: f32[1,32], index: 12, kind: input, shape index: {}]
  %s13 = inlined_call_operand.vmem [shape: f32[1,32], index: 13, kind: input, shape index: {}]
  %s14 = inlined_call_operand.hbm [shape: f32[16,32], index: 14, kind: output, shape index: {}]
  %s15 = sld [smem:[#allocation0]]
  $region74: #{tpu_custom_call.1} parent=0
    _
  %s17 = ssub.s32 1, %s15
  %s18 = scalar_select 0, %s17, %s15
  $region1: #{tpu_custom_call.1} parent=0
    #allocation3 [shape = 'u8[8192]{0}', space=vmem, size = 0x2000, scoped, tag = 'input window, operand 0, single buffered']
    #allocation4 [shape = 's32[1]{0}', space=sflag, size = 0x4, scoped, tag = 'scoped memory for tpu_custom_call.1']
    #allocation5 [shape = 's32[1]{0}', space=sflag, size = 0x4, scoped, tag = 'scoped memory for tpu_custom_call.1']
    #allocation6 [shape = 'u8[8192]{0}', space=vmem, size = 0x2000, scoped, tag = 'input window, operand 1, single buffered']
    #allocation7 [shape = 's32[1]{0}', space=sflag, size = 0x4, scoped, tag = 'scoped memory for tpu_custom_call.1']
    #allocation8 [shape = 'u8[8192]{0}', space=vmem, size = 0x2000, scoped, tag = 'output window, operand 0, single buffered']
    %19 = vsyncpa [#allocation4], 0
    %20 = vsyncpa [#allocation7], 0
    %21 = vsyncpa [#allocation5], 0
    // Predicated region
    $region2: #{tpu_custom_call.1} parent=1 // pred_check
      _
    $region3: #{tpu_custom_call.1} parent=1 // pred_check_branch
      %23 = sbr.rel (0) target = $region5
    $region4: #{tpu_custom_call.1} parent=1 // pred_region
      %s25 = ssub.s32 256, 256
      %26 = vsyncadd [#allocation4], %s25
      %s27 = sshll.u32 [#allocation3], 4
      %s28 = int_to_ptr.vmem [resolvable:$true] %s27
      %33 = dma.hbm_to_vmem [thread:$0]  %s0, 256, %s28, [#allocation4], 128, 128, 8
    $region5: #{tpu_custom_call.1} parent=1 // pred_fallthru
      _
    // Predicated region
    $region6: #{tpu_custom_call.1} parent=1 // pred_check
      _
    $region7: #{tpu_custom_call.1} parent=1 // pred_check_branch
      %35 = sbr.rel (0) target = $region9
    $region8: #{tpu_custom_call.1} parent=1 // pred_region
      %s37 = ssub.s32 256, 256
      %38 = vsyncadd [#allocation7], %s37
      %s39 = sshll.u32 [#allocation6], 4
      %s40 = int_to_ptr.vmem [resolvable:$true] %s39
      %45 = dma.hbm_to_vmem [thread:$0]  %s1, 256, %s40, [#allocation7], 128, 128, 8
    $region9: #{tpu_custom_call.1} parent=1 // pred_fallthru
      _
    // Predicated region
    $region10: #{tpu_custom_call.1} parent=1 // pred_check
      _
    $region11: #{tpu_custom_call.1} parent=1 // pred_check_branch
      %47 = sbr.rel (0) target = $region13
    $region12: #{tpu_custom_call.1} parent=1 // pred_region
      _
    $region13: #{tpu_custom_call.1} parent=1 // pred_fallthru
      _
    // Predicated region
    $region14: #{tpu_custom_call.1} parent=1 // pred_check
      _
    $region15: #{tpu_custom_call.1} parent=1 // pred_check_branch
      %49 = sbr.rel (0) target = $region17
    $region16: #{tpu_custom_call.1} parent=1 // pred_region
      _
    $region17: #{tpu_custom_call.1} parent=1 // pred_fallthru
      _
    // Predicated region
    $region18: #{tpu_custom_call.1} parent=1 // pred_check
      _
    $region19: #{tpu_custom_call.1} parent=1 // pred_check_branch
      %51 = sbr.rel (0) target = $region21
    $region20: #{tpu_custom_call.1} parent=1 // pred_region
      _
    $region21: #{tpu_custom_call.1} parent=1 // pred_fallthru
      _
    // Predicated region
    $region22: #{tpu_custom_call.1} parent=1 // pred_check
      _
    $region23: #{tpu_custom_call.1} parent=1 // pred_check_branch
      %53 = sbr.rel (0) target = $region25
    $region24: #{tpu_custom_call.1} parent=1 // pred_region
      _
    $region25: #{tpu_custom_call.1} parent=1 // pred_fallthru
      _
    // Predicated region
    $region26: #{tpu_custom_call.1} parent=1 // pred_check
      _
    $region27: #{tpu_custom_call.1} parent=1 // pred_check_branch
      %55 = sbr.rel (0) target = $region29
    $region28: #{tpu_custom_call.1} parent=1 // pred_region
      _
    $region29: #{tpu_custom_call.1} parent=1 // pred_fallthru
      _
    // Predicated region
    $region30: #{tpu_custom_call.1} parent=1 // pred_check
      _
    $region31: #{tpu_custom_call.1} parent=1 // pred_check_branch
      %57 = sbr.rel (0) target = $region33
    $region32: #{tpu_custom_call.1} parent=1 // pred_region
      _
    $region33: #{tpu_custom_call.1} parent=1 // pred_fallthru
      _
    // Predicated region
    $region34: #{tpu_custom_call.1} parent=1 // pred_check
      _
    $region35: #{tpu_custom_call.1} parent=1 // pred_check_branch
      %59 = sbr.rel (0) target = $region37
    $region36: #{tpu_custom_call.1} parent=1 // pred_region
      _
    $region37: #{tpu_custom_call.1} parent=1 // pred_fallthru
      _
    // Predicated region
    $region38: #{tpu_custom_call.1} parent=1 // pred_check
      _
    $region39: #{tpu_custom_call.1} parent=1 // pred_check_branch
      %61 = sbr.rel (0) target = $region41
    $region40: #{tpu_custom_call.1} parent=1 // pred_region
      _
    $region41: #{tpu_custom_call.1} parent=1 // pred_fallthru
      _
    // Predicated region
    $region42: #{tpu_custom_call.1} parent=1 // pred_check
      _
    $region43: #{tpu_custom_call.1} parent=1 // pred_check_branch
      %63 = sbr.rel (0) target = $region45
    $region44: #{tpu_custom_call.1} parent=1 // pred_region
      _
    $region45: #{tpu_custom_call.1} parent=1 // pred_fallthru
      _
    // Predicated region
    $region46: #{tpu_custom_call.1} parent=1 // pred_check
      _
    $region47: #{tpu_custom_call.1} parent=1 // pred_check_branch
      %65 = sbr.rel (0) target = $region49
    $region48: #{tpu_custom_call.1} parent=1 // pred_region
      _
    $region49: #{tpu_custom_call.1} parent=1 // pred_fallthru
      _
    // Predicated region
    $region50: #{tpu_custom_call.1} parent=1 // pred_check
      _
    $region51: #{tpu_custom_call.1} parent=1 // pred_check_branch
      %67 = sbr.rel (0) target = $region53
    $region52: #{tpu_custom_call.1} parent=1 // pred_region
      _
    $region53: #{tpu_custom_call.1} parent=1 // pred_fallthru
      _
    // Predicated region
    $region54: #{tpu_custom_call.1} parent=1 // pred_check
      _
    $region55: #{tpu_custom_call.1} parent=1 // pred_check_branch
      %69 = sbr.rel (0) target = $region57
    $region56: #{tpu_custom_call.1} parent=1 // pred_region
      _
    $region57: #{tpu_custom_call.1} parent=1 // pred_fallthru
      _
    // Predicated region
    $region58: #{tpu_custom_call.1} parent=1 // pred_check
      _
    $region59: #{tpu_custom_call.1} parent=1 // pred_check_branch
      %71 = sbr.rel (0) target = $region61
    $region60: #{tpu_custom_call.1} parent=1 // pred_region
      %72 = dma.done [#allocation4], 256
    $region61: #{tpu_custom_call.1} parent=1 // pred_fallthru
      _
    // Predicated region
    $region62: #{tpu_custom_call.1} parent=1 // pred_check
      _
    $region63: #{tpu_custom_call.1} parent=1 // pred_check_branch
      %74 = sbr.rel (0) target = $region65
    $region64: #{tpu_custom_call.1} parent=1 // pred_region
      %75 = dma.done [#allocation7], 256
    $region65: #{tpu_custom_call.1} parent=1 // pred_fallthru
      _
    %v76 = vld [vmem:[#allocation3] sm:$0xff]
    %v77 = vld [vmem:[#allocation3 + $0x8] sm:$0xff]
    %v78 = vld [vmem:[%s2] sm:$0xff]
    %v79 = vld [vmem:[%s2 + $0x8] sm:$0xff]
    %v80 = vld [vmem:[%s2 + $0x10] sm:$0xff]
    %v81 = vld [vmem:[%s2 + $0x18] sm:$0xff]
    %v82 = vld [vmem:[%s3] sm:$0x1]
    %v84 = vlaneseq
    %v85 = vshrl.u32 %v84, 7
    %v86 = vsub.s32 0, %v85
    %v87 = vrot.slane %v82, %v86
    %vm89 = vcmask 261120
    %v91 = vsel %vm89, %v76, 0
    %v94 = vsel %vm89, %v77, 0
    %96 = vmatprep.subr.mxu0 0.0
    %97 = vmatpush1.msra.mxu0 0.0
    %98 = vmatprep.subr.mxu0 0.0
    %99 = vmatpush1.msra.mxu0 0.0
    %100 = vmatprep.subr.mxu0 0.0
    %101 = vmatpush1.msra.mxu0 0.0
    %102 = vmatprep.subr.mxu0 0.0
    %103 = vmatpush1.msra.mxu0 0.0
    %104 = vmatprep.subr.mxu0 0.0
    %105 = vmatpush1.msra.mxu0 0.0
    %106 = vmatprep.subr.mxu0 0.0
    %107 = vmatpush1.msra.mxu0 0.0
    %108 = vmatprep.subr.mxu0 0.0
    %109 = vmatpush1.msra.mxu0 0.0
    %110 = vmatprep.subr.mxu0 0.0
    %111 = vmatpush1.msra.mxu0 0.0
    %112 = vmatprep.subr.mxu0 0.0
    %113 = vmatpush1.msra.mxu0 0.0
    %114 = vmatprep.subr.mxu0 0.0
    %115 = vmatpush1.msra.mxu0 0.0
    %116 = vmatprep.subr.mxu0 0.0
    %117 = vmatpush1.msra.mxu0 0.0
    %118 = vmatprep.subr.mxu0 0.0
    %119 = vmatpush1.msra.mxu0 0.0
    %120 = vmatprep.subr.mxu0 0.0
    %121 = vmatpush1.msra.mxu0 %v81
    %122 = vmatprep.subr.mxu0 0.0
    %123 = vmatpush1.msra.mxu0 %v80
    %124 = vmatprep.subr.mxu0 0.0
    %125 = vmatpush1.msra.mxu0 %v79
    %126 = vmatprep.subr.mxu0 0.0
    %127 = vmatpush1.msra.mxu0 %v78
    %128 = vmatprep.subr.mxu0 0.0
    %129 = vmatpush2.msra.mxu0 0.0
    %130 = vmatprep.subr.mxu0 0.0
    %131 = vmatpush2.msra.mxu0 0.0
    %132 = vmatprep.subr.mxu0 0.0
    %133 = vmatpush2.msra.mxu0 0.0
    %134 = vmatprep.subr.mxu0 0.0
    %135 = vmatpush2.msra.mxu0 0.0
    %136 = vmatprep.subr.mxu0 0.0
    %137 = vmatpush2.msra.mxu0 0.0
    %138 = vmatprep.subr.mxu0 0.0
    %139 = vmatpush2.msra.mxu0 0.0
    %140 = vmatprep.subr.mxu0 0.0
    %141 = vmatpush2.msra.mxu0 0.0
    %142 = vmatprep.subr.mxu0 0.0
    %143 = vmatpush2.msra.mxu0 0.0
    %144 = vmatprep.subr.mxu0 0.0
    %145 = vmatpush2.msra.mxu0 0.0
    %146 = vmatprep.subr.mxu0 0.0
    %147 = vmatpush2.msra.mxu0 0.0
    %148 = vmatprep.subr.mxu0 0.0
    %149 = vmatpush2.msra.mxu0 0.0
    %150 = vmatprep.subr.mxu0 0.0
    %151 = vmatpush2.msra.mxu0 0.0
    %152 = vmatprep.subr.mxu0 0.0
    %153 = vmatpush2.msra.mxu0 0.0
    %154 = vmatprep.subr.mxu0 0.0
    %155 = vmatpush2.msra.mxu0 0.0
    %156 = vmatprep.subr.mxu0 0.0
    %157 = vmatpush2.msra.mxu0 0.0
    %158 = vmatprep.subr.mxu0 0.0
    %159 = vmatpush2.msra.mxu0 0.0
    %160 = vmatprep.mubr.f32.mxu0 0.0
    %161 = vmatmul.mubr.f32.gmra.mxu0 %v91
    %v162 = vpop.f32.mrf.mxu0
    %v163 = vadd.f32 %v87, %v162
    %v164 = vpop.f32.mrf.mxu0
    %165 = vmatprep.mubr.f32.mxu0 0.0
    %166 = vmatmul.mubr.f32.gmra.mxu0 %v94
    %v167 = vpop.f32.mrf.mxu0
    %v168 = vadd.f32 %v87, %v167
    %v169 = vpop.f32.mrf.mxu0
    %170 = vdwg.mxu0
    %v171 = vld [vmem:[#allocation6] sm:$0xff]
    %173 = vrot.lane.b32.xlu0 %v163, 96
    %v174 = vpop.permute.xlu0 %173
    %vm175 = vcmask 64512
    %v176 = vsel %vm175, %v163, 0
    %v178 = vsel %vm175, %v174, 0
    %180 = vmatprep.subr.mxu0 0.0
    %181 = vmatpush1.xpose.msra.mxu0 0.0
    %182 = vmatprep.subr.mxu0 0.0
    %183 = vmatpush1.xpose.msra.mxu0 0.0
    %184 = vmatprep.subr.mxu0 0.0
    %185 = vmatpush1.xpose.msra.mxu0 0.0
    %186 = vmatprep.subr.mxu0 0.0
    %187 = vmatpush1.xpose.msra.mxu0 0.0
    %188 = vmatprep.subr.mxu0 0.0
    %189 = vmatpush1.xpose.msra.mxu0 0.0
    %190 = vmatprep.subr.mxu0 0.0
    %191 = vmatpush1.xpose.msra.mxu0 0.0
    %192 = vmatprep.subr.mxu0 0.0
    %193 = vmatpush1.xpose.msra.mxu0 0.0
    %194 = vmatprep.subr.mxu0 0.0
    %195 = vmatpush1.xpose.msra.mxu0 0.0
    %196 = vmatprep.subr.mxu0 0.0
    %197 = vmatpush1.xpose.msra.mxu0 0.0
    %198 = vmatprep.subr.mxu0 0.0
    %199 = vmatpush1.xpose.msra.mxu0 0.0
    %200 = vmatprep.subr.mxu0 0.0
    %201 = vmatpush1.xpose.msra.mxu0 0.0
    %202 = vmatprep.subr.mxu0 0.0
    %203 = vmatpush1.xpose.msra.mxu0 0.0
    %204 = vmatprep.subr.mxu0 0.0
    %205 = vmatpush1.xpose.msra.mxu0 0.0
    %206 = vmatprep.subr.mxu0 0.0
    %207 = vmatpush1.xpose.msra.mxu0 0.0
    %208 = vmatprep.subr.mxu0 0.0
    %209 = vmatpush1.xpose.msra.mxu0 0.0
    %210 = vmatprep.subr.mxu0 0.0
    %211 = vmatpush1.xpose.msra.mxu0 %v178
    %212 = vmatprep.subr.mxu0 0.0
    %213 = vmatpush2.xpose.msra.mxu0 0.0
    %214 = vmatprep.subr.mxu0 0.0
    %215 = vmatpush2.xpose.msra.mxu0 0.0
    %216 = vmatprep.subr.mxu0 0.0
    %217 = vmatpush2.xpose.msra.mxu0 0.0
    %218 = vmatprep.subr.mxu0 0.0
    %219 = vmatpush2.xpose.msra.mxu0 0.0
    %220 = vmatprep.subr.mxu0 0.0
    %221 = vmatpush2.xpose.msra.mxu0 0.0
    %222 = vmatprep.subr.mxu0 0.0
    %223 = vmatpush2.xpose.msra.mxu0 0.0
    %224 = vmatprep.subr.mxu0 0.0
    %225 = vmatpush2.xpose.msra.mxu0 0.0
    %226 = vmatprep.subr.mxu0 0.0
    %227 = vmatpush2.xpose.msra.mxu0 0.0
    %228 = vmatprep.subr.mxu0 0.0
    %229 = vmatpush2.xpose.msra.mxu0 0.0
    %230 = vmatprep.subr.mxu0 0.0
    %231 = vmatpush2.xpose.msra.mxu0 0.0
    %232 = vmatprep.subr.mxu0 0.0
    %233 = vmatpush2.xpose.msra.mxu0 0.0
    %234 = vmatprep.subr.mxu0 0.0
    %235 = vmatpush2.xpose.msra.mxu0 0.0
    %236 = vmatprep.subr.mxu0 0.0
    %237 = vmatpush2.xpose.msra.mxu0 0.0
    %238 = vmatprep.subr.mxu0 0.0
    %239 = vmatpush2.xpose.msra.mxu0 0.0
    %240 = vmatprep.subr.mxu0 0.0
    %241 = vmatpush2.xpose.msra.mxu0 0.0
    %242 = vmatprep.subr.mxu0 0.0
    %243 = vmatpush2.xpose.msra.mxu0 0.0
    %244 = vmatprep.mubr.f32.mxu0 0.0
    %245 = vmatmul.mubr.f32.gmra.mxu0 %v176
    %v246 = vpop.f32.mrf.mxu0
    %v247 = vadd.f32 %v171, %v246
    %v248 = vpop.f32.mrf.mxu0
    %249 = vdwg.mxu0
    %v250 = vsel %vm175, %v247, -inf
    %251 = vmax.xlane.f32.xlu0 %v250
    %v252 = vpop.xlane.xlu0 %251
    %v253 = vsub.f32 %v247, %v252
    %v254 = vmul.f32 %v253, 1.442695
    %v255 = vpow.pop %v254
    %v256 = vsel %vm175, %v255, 0.0
    %257 = vadd.xlane.f32.xlu0 %v256
    %v258 = vpop.xlane.xlu0 %257
    %v259 = vrcp.pop %v258
    %v260 = vmul.f32 %v258, %v259
    %v261 = vsub.f32 2.0, %v260
    %v262 = vmul.f32 %v259, %v261
    %v263 = vmul.f32 %v255, %v262
    %264 = vrot.lane.b32.xlu0 %v163, 64
    %v265 = vpop.permute.xlu0 %264
    %v268 = vsel %vm175, %v263, 0
    %270 = vmatprep.subr.mxu0 0.0
    %271 = vmatpush1.msra.mxu0 0.0
    %272 = vmatprep.subr.mxu0 0.0
    %273 = vmatpush1.msra.mxu0 0.0
    %274 = vmatprep.subr.mxu0 0.0
    %275 = vmatpush1.msra.mxu0 0.0
    %276 = vmatprep.subr.mxu0 0.0
    %277 = vmatpush1.msra.mxu0 0.0
    %278 = vmatprep.subr.mxu0 0.0
    %279 = vmatpush1.msra.mxu0 0.0
    %280 = vmatprep.subr.mxu0 0.0
    %281 = vmatpush1.msra.mxu0 0.0
    %282 = vmatprep.subr.mxu0 0.0
    %283 = vmatpush1.msra.mxu0 0.0
    %284 = vmatprep.subr.mxu0 0.0
    %285 = vmatpush1.msra.mxu0 0.0
    %286 = vmatprep.subr.mxu0 0.0
    %287 = vmatpush1.msra.mxu0 0.0
    %288 = vmatprep.subr.mxu0 0.0
    %289 = vmatpush1.msra.mxu0 0.0
    %290 = vmatprep.subr.mxu0 0.0
    %291 = vmatpush1.msra.mxu0 0.0
    %292 = vmatprep.subr.mxu0 0.0
    %293 = vmatpush1.msra.mxu0 0.0
    %294 = vmatprep.subr.mxu0 0.0
    %295 = vmatpush1.msra.mxu0 0.0
    %296 = vmatprep.subr.mxu0 0.0
    %297 = vmatpush1.msra.mxu0 0.0
    %298 = vmatprep.subr.mxu0 0.0
    %299 = vmatpush1.msra.mxu0 0.0
    %300 = vmatprep.subr.mxu0 0.0
    %301 = vmatpush1.msra.mxu0 %v265
    %302 = vmatprep.subr.mxu0 0.0
    %303 = vmatpush2.msra.mxu0 0.0
    %304 = vmatprep.subr.mxu0 0.0
    %305 = vmatpush2.msra.mxu0 0.0
    %306 = vmatprep.subr.mxu0 0.0
    %307 = vmatpush2.msra.mxu0 0.0
    %308 = vmatprep.subr.mxu0 0.0
    %309 = vmatpush2.msra.mxu0 0.0
    %310 = vmatprep.subr.mxu0 0.0
    %311 = vmatpush2.msra.mxu0 0.0
    %312 = vmatprep.subr.mxu0 0.0
    %313 = vmatpush2.msra.mxu0 0.0
    %314 = vmatprep.subr.mxu0 0.0
    %315 = vmatpush2.msra.mxu0 0.0
    %316 = vmatprep.subr.mxu0 0.0
    %317 = vmatpush2.msra.mxu0 0.0
    %318 = vmatprep.subr.mxu0 0.0
    %319 = vmatpush2.msra.mxu0 0.0
    %320 = vmatprep.subr.mxu0 0.0
    %321 = vmatpush2.msra.mxu0 0.0
    %322 = vmatprep.subr.mxu0 0.0
    %323 = vmatpush2.msra.mxu0 0.0
    %324 = vmatprep.subr.mxu0 0.0
    %325 = vmatpush2.msra.mxu0 0.0
    %326 = vmatprep.subr.mxu0 0.0
    %327 = vmatpush2.msra.mxu0 0.0
    %328 = vmatprep.subr.mxu0 0.0
    %329 = vmatpush2.msra.mxu0 0.0
    %330 = vmatprep.subr.mxu0 0.0
    %331 = vmatpush2.msra.mxu0 0.0
    %332 = vmatprep.subr.mxu0 0.0
    %333 = vmatpush2.msra.mxu0 0.0
    %334 = vmatprep.mubr.f32.mxu0 0.0
    %335 = vmatmul.mubr.f32.gmra.mxu0 %v268
    %v336 = vpop.f32.mrf.mxu0
    %v337 = vadd.f32 0.0, %v336
    %v338 = vpop.f32.mrf.mxu0
    %339 = vdwg.mxu0
    %340 = vst.msk [vmem:[#allocation2] sm:$0xff] %vm175, %v337
    %341 = vrot.lane.b32.xlu0 %v163, 120
    %v342 = vpop.permute.xlu0 %341
    %343 = vrot.lane.b32.xlu0 %v163, 88
    %v344 = vpop.permute.xlu0 %343
    %v345 = vsel %vm175, %v342, 0
    %v347 = vsel %vm175, %v344, 0
    %349 = vmatprep.subr.mxu0 0.0
    %350 = vmatpush1.xpose.msra.mxu0 0.0
    %351 = vmatprep.subr.mxu0 0.0
    %352 = vmatpush1.xpose.msra.mxu0 0.0
    %353 = vmatprep.subr.mxu0 0.0
    %354 = vmatpush1.xpose.msra.mxu0 0.0
    %355 = vmatprep.subr.mxu0 0.0
    %356 = vmatpush1.xpose.msra.mxu0 0.0
    %357 = vmatprep.subr.mxu0 0.0
    %358 = vmatpush1.xpose.msra.mxu0 0.0
    %359 = vmatprep.subr.mxu0 0.0
    %360 = vmatpush1.xpose.msra.mxu0 0.0
    %361 = vmatprep.subr.mxu0 0.0
    %362 = vmatpush1.xpose.msra.mxu0 0.0
    %363 = vmatprep.subr.mxu0 0.0
    %364 = vmatpush1.xpose.msra.mxu0 0.0
    %365 = vmatprep.subr.mxu0 0.0
    %366 = vmatpush1.xpose.msra.mxu0 0.0
    %367 = vmatprep.subr.mxu0 0.0
    %368 = vmatpush1.xpose.msra.mxu0 0.0
    %369 = vmatprep.subr.mxu0 0.0
    %370 = vmatpush1.xpose.msra.mxu0 0.0
    %371 = vmatprep.subr.mxu0 0.0
    %372 = vmatpush1.xpose.msra.mxu0 0.0
    %373 = vmatprep.subr.mxu0 0.0
    %374 = vmatpush1.xpose.msra.mxu0 0.0
    %375 = vmatprep.subr.mxu0 0.0
    %376 = vmatpush1.xpose.msra.mxu0 0.0
    %377 = vmatprep.subr.mxu0 0.0
    %378 = vmatpush1.xpose.msra.mxu0 0.0
    %379 = vmatprep.subr.mxu0 0.0
    %380 = vmatpush1.xpose.msra.mxu0 %v347
    %381 = vmatprep.subr.mxu0 0.0
    %382 = vmatpush2.xpose.msra.mxu0 0.0
    %383 = vmatprep.subr.mxu0 0.0
    %384 = vmatpush2.xpose.msra.mxu0 0.0
    %385 = vmatprep.subr.mxu0 0.0
    %386 = vmatpush2.xpose.msra.mxu0 0.0
    %387 = vmatprep.subr.mxu0 0.0
    %388 = vmatpush2.xpose.msra.mxu0 0.0
    %389 = vmatprep.subr.mxu0 0.0
    %390 = vmatpush2.xpose.msra.mxu0 0.0
    %391 = vmatprep.subr.mxu0 0.0
    %392 = vmatpush2.xpose.msra.mxu0 0.0
    %393 = vmatprep.subr.mxu0 0.0
    %394 = vmatpush2.xpose.msra.mxu0 0.0
    %395 = vmatprep.subr.mxu0 0.0
    %396 = vmatpush2.xpose.msra.mxu0 0.0
    %397 = vmatprep.subr.mxu0 0.0
    %398 = vmatpush2.xpose.msra.mxu0 0.0
    %399 = vmatprep.subr.mxu0 0.0
    %400 = vmatpush2.xpose.msra.mxu0 0.0
    %401 = vmatprep.subr.mxu0 0.0
    %402 = vmatpush2.xpose.msra.mxu0 0.0
    %403 = vmatprep.subr.mxu0 0.0
    %404 = vmatpush2.xpose.msra.mxu0 0.0
    %405 = vmatprep.subr.mxu0 0.0
    %406 = vmatpush2.xpose.msra.mxu0 0.0
    %407 = vmatprep.subr.mxu0 0.0
    %408 = vmatpush2.xpose.msra.mxu0 0.0
    %409 = vmatprep.subr.mxu0 0.0
    %410 = vmatpush2.xpose.msra.mxu0 0.0
    %411 = vmatprep.subr.mxu0 0.0
    %412 = vmatpush2.xpose.msra.mxu0 0.0
    %413 = vmatprep.mubr.f32.mxu0 0.0
    %414 = vmatmul.mubr.f32.gmra.mxu0 %v345
    %v415 = vpop.f32.mrf.mxu0
    %v416 = vadd.f32 %v171, %v415
    %v417 = vpop.f32.mrf.mxu0
    %418 = vdwg.mxu0
    %v419 = vsel %vm175, %v416, -inf
    %420 = vmax.xlane.f32.xlu0 %v419
    %v421 = vpop.xlane.xlu0 %420
    %v422 = vsub.f32 %v416, %v421
    %v423 = vmul.f32 %v422, 1.442695
    %v424 = vpow.pop %v423
    %v425 = vsel %vm175, %v424, 0.0
    %426 = vadd.xlane.f32.xlu0 %v425
    %v427 = vpop.xlane.xlu0 %426
    %v428 = vrcp.pop %v427
    %v429 = vmul.f32 %v427, %v428
    %v430 = vsub.f32 2.0, %v429
    %v431 = vmul.f32 %v428, %v430
    %v432 = vmul.f32 %v424, %v431
    %433 = vrot.lane.b32.xlu0 %v163, 56
    %v434 = vpop.permute.xlu0 %433
    %v437 = vsel %vm175, %v432, 0
    %439 = vmatprep.subr.mxu0 0.0
    %440 = vmatpush1.msra.mxu0 0.0
    %441 = vmatprep.subr.mxu0 0.0
    %442 = vmatpush1.msra.mxu0 0.0
    %443 = vmatprep.subr.mxu0 0.0
    %444 = vmatpush1.msra.mxu0 0.0
    %445 = vmatprep.subr.mxu0 0.0
    %446 = vmatpush1.msra.mxu0 0.0
    %447 = vmatprep.subr.mxu0 0.0
    %448 = vmatpush1.msra.mxu0 0.0
    %449 = vmatprep.subr.mxu0 0.0
    %450 = vmatpush1.msra.mxu0 0.0
    %451 = vmatprep.subr.mxu0 0.0
    %452 = vmatpush1.msra.mxu0 0.0
    %453 = vmatprep.subr.mxu0 0.0
    %454 = vmatpush1.msra.mxu0 0.0
    %455 = vmatprep.subr.mxu0 0.0
    %456 = vmatpush1.msra.mxu0 0.0
    %457 = vmatprep.subr.mxu0 0.0
    %458 = vmatpush1.msra.mxu0 0.0
    %459 = vmatprep.subr.mxu0 0.0
    %460 = vmatpush1.msra.mxu0 0.0
    %461 = vmatprep.subr.mxu0 0.0
    %462 = vmatpush1.msra.mxu0 0.0
    %463 = vmatprep.subr.mxu0 0.0
    %464 = vmatpush1.msra.mxu0 0.0
    %465 = vmatprep.subr.mxu0 0.0
    %466 = vmatpush1.msra.mxu0 0.0
    %467 = vmatprep.subr.mxu0 0.0
    %468 = vmatpush1.msra.mxu0 0.0
    %469 = vmatprep.subr.mxu0 0.0
    %470 = vmatpush1.msra.mxu0 %v434
    %471 = vmatprep.subr.mxu0 0.0
    %472 = vmatpush2.msra.mxu0 0.0
    %473 = vmatprep.subr.mxu0 0.0
    %474 = vmatpush2.msra.mxu0 0.0
    %475 = vmatprep.subr.mxu0 0.0
    %476 = vmatpush2.msra.mxu0 0.0
    %477 = vmatprep.subr.mxu0 0.0
    %478 = vmatpush2.msra.mxu0 0.0
    %479 = vmatprep.subr.mxu0 0.0
    %480 = vmatpush2.msra.mxu0 0.0
    %481 = vmatprep.subr.mxu0 0.0
    %482 = vmatpush2.msra.mxu0 0.0
    %483 = vmatprep.subr.mxu0 0.0
    %484 = vmatpush2.msra.mxu0 0.0
    %485 = vmatprep.subr.mxu0 0.0
    %486 = vmatpush2.msra.mxu0 0.0
    %487 = vmatprep.subr.mxu0 0.0
    %488 = vmatpush2.msra.mxu0 0.0
    %489 = vmatprep.subr.mxu0 0.0
    %490 = vmatpush2.msra.mxu0 0.0
    %491 = vmatprep.subr.mxu0 0.0
    %492 = vmatpush2.msra.mxu0 0.0
    %493 = vmatprep.subr.mxu0 0.0
    %494 = vmatpush2.msra.mxu0 0.0
    %495 = vmatprep.subr.mxu0 0.0
    %496 = vmatpush2.msra.mxu0 0.0
    %497 = vmatprep.subr.mxu0 0.0
    %498 = vmatpush2.msra.mxu0 0.0
    %499 = vmatprep.subr.mxu0 0.0
    %500 = vmatpush2.msra.mxu0 0.0
    %501 = vmatprep.subr.mxu0 0.0
    %502 = vmatpush2.msra.mxu0 0.0
    %503 = vmatprep.mubr.f32.mxu0 0.0
    %504 = vmatmul.mubr.f32.gmra.mxu0 %v437
    %v505 = vpop.f32.mrf.mxu0
    %v506 = vadd.f32 0.0, %v505
    %v507 = vpop.f32.mrf.mxu0
    %508 = vdwg.mxu0
    %510 = vrot.lane.b32.xlu0 %v506, 8
    %v511 = vpop.permute.xlu0 %510
    %vm513 = vcmask 130112
    %514 = vst.msk [vmem:[#allocation2] sm:$0xff] %vm513, %v511
    %515 = vrot.lane.b32.xlu0 %v163, 112
    %v516 = vpop.permute.xlu0 %515
    %517 = vrot.lane.b32.xlu0 %v163, 80
    %v518 = vpop.permute.xlu0 %517
    %v519 = vsel %vm175, %v516, 0
    %v521 = vsel %vm175, %v518, 0
    %523 = vmatprep.subr.mxu0 0.0
    %524 = vmatpush1.xpose.msra.mxu0 0.0
    %525 = vmatprep.subr.mxu0 0.0
    %526 = vmatpush1.xpose.msra.mxu0 0.0
    %527 = vmatprep.subr.mxu0 0.0
    %528 = vmatpush1.xpose.msra.mxu0 0.0
    %529 = vmatprep.subr.mxu0 0.0
    %530 = vmatpush1.xpose.msra.mxu0 0.0
    %531 = vmatprep.subr.mxu0 0.0
    %532 = vmatpush1.xpose.msra.mxu0 0.0
    %533 = vmatprep.subr.mxu0 0.0
    %534 = vmatpush1.xpose.msra.mxu0 0.0
    %535 = vmatprep.subr.mxu0 0.0
    %536 = vmatpush1.xpose.msra.mxu0 0.0
    %537 = vmatprep.subr.mxu0 0.0
    %538 = vmatpush1.xpose.msra.mxu0 0.0
    %539 = vmatprep.subr.mxu0 0.0
    %540 = vmatpush1.xpose.msra.mxu0 0.0
    %541 = vmatprep.subr.mxu0 0.0
    %542 = vmatpush1.xpose.msra.mxu0 0.0
    %543 = vmatprep.subr.mxu0 0.0
    %544 = vmatpush1.xpose.msra.mxu0 0.0
    %545 = vmatprep.subr.mxu0 0.0
    %546 = vmatpush1.xpose.msra.mxu0 0.0
    %547 = vmatprep.subr.mxu0 0.0
    %548 = vmatpush1.xpose.msra.mxu0 0.0
    %549 = vmatprep.subr.mxu0 0.0
    %550 = vmatpush1.xpose.msra.mxu0 0.0
    %551 = vmatprep.subr.mxu0 0.0
    %552 = vmatpush1.xpose.msra.mxu0 0.0
    %553 = vmatprep.subr.mxu0 0.0
    %554 = vmatpush1.xpose.msra.mxu0 %v521
    %555 = vmatprep.subr.mxu0 0.0
    %556 = vmatpush2.xpose.msra.mxu0 0.0
    %557 = vmatprep.subr.mxu0 0.0
    %558 = vmatpush2.xpose.msra.mxu0 0.0
    %559 = vmatprep.subr.mxu0 0.0
    %560 = vmatpush2.xpose.msra.mxu0 0.0
    %561 = vmatprep.subr.mxu0 0.0
    %562 = vmatpush2.xpose.msra.mxu0 0.0
    %563 = vmatprep.subr.mxu0 0.0
    %564 = vmatpush2.xpose.msra.mxu0 0.0
    %565 = vmatprep.subr.mxu0 0.0
    %566 = vmatpush2.xpose.msra.mxu0 0.0
    %567 = vmatprep.subr.mxu0 0.0
    %568 = vmatpush2.xpose.msra.mxu0 0.0
    %569 = vmatprep.subr.mxu0 0.0
    %570 = vmatpush2.xpose.msra.mxu0 0.0
    %571 = vmatprep.subr.mxu0 0.0
    %572 = vmatpush2.xpose.msra.mxu0 0.0
    %573 = vmatprep.subr.mxu0 0.0
    %574 = vmatpush2.xpose.msra.mxu0 0.0
    %575 = vmatprep.subr.mxu0 0.0
    %576 = vmatpush2.xpose.msra.mxu0 0.0
    %577 = vmatprep.subr.mxu0 0.0
    %578 = vmatpush2.xpose.msra.mxu0 0.0
    %579 = vmatprep.subr.mxu0 0.0
    %580 = vmatpush2.xpose.msra.mxu0 0.0
    %581 = vmatprep.subr.mxu0 0.0
    %582 = vmatpush2.xpose.msra.mxu0 0.0
    %583 = vmatprep.subr.mxu0 0.0
    %584 = vmatpush2.xpose.msra.mxu0 0.0
    %585 = vmatprep.subr.mxu0 0.0
    %586 = vmatpush2.xpose.msra.mxu0 0.0
    %587 = vmatprep.mubr.f32.mxu0 0.0
    %588 = vmatmul.mubr.f32.gmra.mxu0 %v519
    %v589 = vpop.f32.mrf.mxu0
    %v590 = vadd.f32 %v171, %v589
    %v591 = vpop.f32.mrf.mxu0
    %592 = vdwg.mxu0
    %v593 = vsel %vm175, %v590, -inf
    %594 = vmax.xlane.f32.xlu0 %v593
    %v595 = vpop.xlane.xlu0 %594
    %v596 = vsub.f32 %v590, %v595
    %v597 = vmul.f32 %v596, 1.442695
    %v598 = vpow.pop %v597
    %v599 = vsel %vm175, %v598, 0.0
    %600 = vadd.xlane.f32.xlu0 %v599
    %v601 = vpop.xlane.xlu0 %600
    %v602 = vrcp.pop %v601
    %v603 = vmul.f32 %v601, %v602
    %v604 = vsub.f32 2.0, %v603
    %v605 = vmul.f32 %v602, %v604
    %v606 = vmul.f32 %v598, %v605
    %607 = vrot.lane.b32.xlu0 %v163, 48
    %v608 = vpop.permute.xlu0 %607
    %v611 = vsel %vm175, %v606, 0
    %613 = vmatprep.subr.mxu0 0.0
    %614 = vmatpush1.msra.mxu0 0.0
    %615 = vmatprep.subr.mxu0 0.0
    %616 = vmatpush1.msra.mxu0 0.0
    %617 = vmatprep.subr.mxu0 0.0
    %618 = vmatpush1.msra.mxu0 0.0
    %619 = vmatprep.subr.mxu0 0.0
    %620 = vmatpush1.msra.mxu0 0.0
    %621 = vmatprep.subr.mxu0 0.0
    %622 = vmatpush1.msra.mxu0 0.0
    %623 = vmatprep.subr.mxu0 0.0
    %624 = vmatpush1.msra.mxu0 0.0
    %625 = vmatprep.subr.mxu0 0.0
    %626 = vmatpush1.msra.mxu0 0.0
    %627 = vmatprep.subr.mxu0 0.0
    %628 = vmatpush1.msra.mxu0 0.0
    %629 = vmatprep.subr.mxu0 0.0
    %630 = vmatpush1.msra.mxu0 0.0
    %631 = vmatprep.subr.mxu0 0.0
    %632 = vmatpush1.msra.mxu0 0.0
    %633 = vmatprep.subr.mxu0 0.0
    %634 = vmatpush1.msra.mxu0 0.0
    %635 = vmatprep.subr.mxu0 0.0
    %636 = vmatpush1.msra.mxu0 0.0
    %637 = vmatprep.subr.mxu0 0.0
    %638 = vmatpush1.msra.mxu0 0.0
    %639 = vmatprep.subr.mxu0 0.0
    %640 = vmatpush1.msra.mxu0 0.0
    %641 = vmatprep.subr.mxu0 0.0
    %642 = vmatpush1.msra.mxu0 0.0
    %643 = vmatprep.subr.mxu0 0.0
    %644 = vmatpush1.msra.mxu0 %v608
    %645 = vmatprep.subr.mxu0 0.0
    %646 = vmatpush2.msra.mxu0 0.0
    %647 = vmatprep.subr.mxu0 0.0
    %648 = vmatpush2.msra.mxu0 0.0
    %649 = vmatprep.subr.mxu0 0.0
    %650 = vmatpush2.msra.mxu0 0.0
    %651 = vmatprep.subr.mxu0 0.0
    %652 = vmatpush2.msra.mxu0 0.0
    %653 = vmatprep.subr.mxu0 0.0
    %654 = vmatpush2.msra.mxu0 0.0
    %655 = vmatprep.subr.mxu0 0.0
    %656 = vmatpush2.msra.mxu0 0.0
    %657 = vmatprep.subr.mxu0 0.0
    %658 = vmatpush2.msra.mxu0 0.0
    %659 = vmatprep.subr.mxu0 0.0
    %660 = vmatpush2.msra.mxu0 0.0
    %661 = vmatprep.subr.mxu0 0.0
    %662 = vmatpush2.msra.mxu0 0.0
    %663 = vmatprep.subr.mxu0 0.0
    %664 = vmatpush2.msra.mxu0 0.0
    %665 = vmatprep.subr.mxu0 0.0
    %666 = vmatpush2.msra.mxu0 0.0
    %667 = vmatprep.subr.mxu0 0.0
    %668 = vmatpush2.msra.mxu0 0.0
    %669 = vmatprep.subr.mxu0 0.0
    %670 = vmatpush2.msra.mxu0 0.0
    %671 = vmatprep.subr.mxu0 0.0
    %672 = vmatpush2.msra.mxu0 0.0
    %673 = vmatprep.subr.mxu0 0.0
    %674 = vmatpush2.msra.mxu0 0.0
    %675 = vmatprep.subr.mxu0 0.0
    %676 = vmatpush2.msra.mxu0 0.0
    %677 = vmatprep.mubr.f32.mxu0 0.0
    %678 = vmatmul.mubr.f32.gmra.mxu0 %v611
    %v679 = vpop.f32.mrf.mxu0
    %v680 = vadd.f32 0.0, %v679
    %v681 = vpop.f32.mrf.mxu0
    %682 = vdwg.mxu0
    %684 = vrot.lane.b32.xlu0 %v680, 16
    %v685 = vpop.permute.xlu0 %684
    %vm687 = vcmask 195712
    %688 = vst.msk [vmem:[#allocation2] sm:$0xff] %vm687, %v685
    %689 = vrot.lane.b32.xlu0 %v163, 104
    %v690 = vpop.permute.xlu0 %689
    %691 = vrot.lane.b32.xlu0 %v163, 72
    %v692 = vpop.permute.xlu0 %691
    %v693 = vsel %vm175, %v690, 0
    %v695 = vsel %vm175, %v692, 0
    %697 = vmatprep.subr.mxu0 0.0
    %698 = vmatpush1.xpose.msra.mxu0 0.0
    %699 = vmatprep.subr.mxu0 0.0
    %700 = vmatpush1.xpose.msra.mxu0 0.0
    %701 = vmatprep.subr.mxu0 0.0
    %702 = vmatpush1.xpose.msra.mxu0 0.0
    %703 = vmatprep.subr.mxu0 0.0
    %704 = vmatpush1.xpose.msra.mxu0 0.0
    %705 = vmatprep.subr.mxu0 0.0
    %706 = vmatpush1.xpose.msra.mxu0 0.0
    %707 = vmatprep.subr.mxu0 0.0
    %708 = vmatpush1.xpose.msra.mxu0 0.0
    %709 = vmatprep.subr.mxu0 0.0
    %710 = vmatpush1.xpose.msra.mxu0 0.0
    %711 = vmatprep.subr.mxu0 0.0
    %712 = vmatpush1.xpose.msra.mxu0 0.0
    %713 = vmatprep.subr.mxu0 0.0
    %714 = vmatpush1.xpose.msra.mxu0 0.0
    %715 = vmatprep.subr.mxu0 0.0
    %716 = vmatpush1.xpose.msra.mxu0 0.0
    %717 = vmatprep.subr.mxu0 0.0
    %718 = vmatpush1.xpose.msra.mxu0 0.0
    %719 = vmatprep.subr.mxu0 0.0
    %720 = vmatpush1.xpose.msra.mxu0 0.0
    %721 = vmatprep.subr.mxu0 0.0
    %722 = vmatpush1.xpose.msra.mxu0 0.0
    %723 = vmatprep.subr.mxu0 0.0
    %724 = vmatpush1.xpose.msra.mxu0 0.0
    %725 = vmatprep.subr.mxu0 0.0
    %726 = vmatpush1.xpose.msra.mxu0 0.0
    %727 = vmatprep.subr.mxu0 0.0
    %728 = vmatpush1.xpose.msra.mxu0 %v695
    %729 = vmatprep.subr.mxu0 0.0
    %730 = vmatpush2.xpose.msra.mxu0 0.0
    %731 = vmatprep.subr.mxu0 0.0
    %732 = vmatpush2.xpose.msra.mxu0 0.0
    %733 = vmatprep.subr.mxu0 0.0
    %734 = vmatpush2.xpose.msra.mxu0 0.0
    %735 = vmatprep.subr.mxu0 0.0
    %736 = vmatpush2.xpose.msra.mxu0 0.0
    %737 = vmatprep.subr.mxu0 0.0
    %738 = vmatpush2.xpose.msra.mxu0 0.0
    %739 = vmatprep.subr.mxu0 0.0
    %740 = vmatpush2.xpose.msra.mxu0 0.0
    %741 = vmatprep.subr.mxu0 0.0
    %742 = vmatpush2.xpose.msra.mxu0 0.0
    %743 = vmatprep.subr.mxu0 0.0
    %744 = vmatpush2.xpose.msra.mxu0 0.0
    %745 = vmatprep.subr.mxu0 0.0
    %746 = vmatpush2.xpose.msra.mxu0 0.0
    %747 = vmatprep.subr.mxu0 0.0
    %748 = vmatpush2.xpose.msra.mxu0 0.0
    %749 = vmatprep.subr.mxu0 0.0
    %750 = vmatpush2.xpose.msra.mxu0 0.0
    %751 = vmatprep.subr.mxu0 0.0
    %752 = vmatpush2.xpose.msra.mxu0 0.0
    %753 = vmatprep.subr.mxu0 0.0
    %754 = vmatpush2.xpose.msra.mxu0 0.0
    %755 = vmatprep.subr.mxu0 0.0
    %756 = vmatpush2.xpose.msra.mxu0 0.0
    %757 = vmatprep.subr.mxu0 0.0
    %758 = vmatpush2.xpose.msra.mxu0 0.0
    %759 = vmatprep.subr.mxu0 0.0
    %760 = vmatpush2.xpose.msra.mxu0 0.0
    %761 = vmatprep.mubr.f32.mxu0 0.0
    %762 = vmatmul.mubr.f32.gmra.mxu0 %v693
    %v763 = vpop.f32.mrf.mxu0
    %v764 = vadd.f32 %v171, %v763
    %v765 = vpop.f32.mrf.mxu0
    %766 = vdwg.mxu0
    %v767 = vsel %vm175, %v764, -inf
    %768 = vmax.xlane.f32.xlu0 %v767
    %v769 = vpop.xlane.xlu0 %768
    %v770 = vsub.f32 %v764, %v769
    %v771 = vmul.f32 %v770, 1.442695
    %v772 = vpow.pop %v771
    %v773 = vsel %vm175, %v772, 0.0
    %774 = vadd.xlane.f32.xlu0 %v773
    %v775 = vpop.xlane.xlu0 %774
    %v776 = vrcp.pop %v775
    %v777 = vmul.f32 %v775, %v776
    %v778 = vsub.f32 2.0, %v777
    %v779 = vmul.f32 %v776, %v778
    %v780 = vmul.f32 %v772, %v779
    %781 = vrot.lane.b32.xlu0 %v163, 40
    %v782 = vpop.permute.xlu0 %781
    %v785 = vsel %vm175, %v780, 0
    %787 = vmatprep.subr.mxu0 0.0
    %788 = vmatpush1.msra.mxu0 0.0
    %789 = vmatprep.subr.mxu0 0.0
    %790 = vmatpush1.msra.mxu0 0.0
    %791 = vmatprep.subr.mxu0 0.0
    %792 = vmatpush1.msra.mxu0 0.0
    %793 = vmatprep.subr.mxu0 0.0
    %794 = vmatpush1.msra.mxu0 0.0
    %795 = vmatprep.subr.mxu0 0.0
    %796 = vmatpush1.msra.mxu0 0.0
    %797 = vmatprep.subr.mxu0 0.0
    %798 = vmatpush1.msra.mxu0 0.0
    %799 = vmatprep.subr.mxu0 0.0
    %800 = vmatpush1.msra.mxu0 0.0
    %801 = vmatprep.subr.mxu0 0.0
    %802 = vmatpush1.msra.mxu0 0.0
    %803 = vmatprep.subr.mxu0 0.0
    %804 = vmatpush1.msra.mxu0 0.0
    %805 = vmatprep.subr.mxu0 0.0
    %806 = vmatpush1.msra.mxu0 0.0
    %807 = vmatprep.subr.mxu0 0.0
    %808 = vmatpush1.msra.mxu0 0.0
    %809 = vmatprep.subr.mxu0 0.0
    %810 = vmatpush1.msra.mxu0 0.0
    %811 = vmatprep.subr.mxu0 0.0
    %812 = vmatpush1.msra.mxu0 0.0
    %813 = vmatprep.subr.mxu0 0.0
    %814 = vmatpush1.msra.mxu0 0.0
    %815 = vmatprep.subr.mxu0 0.0
    %816 = vmatpush1.msra.mxu0 0.0
    %817 = vmatprep.subr.mxu0 0.0
    %818 = vmatpush1.msra.mxu0 %v782
    %819 = vmatprep.subr.mxu0 0.0
    %820 = vmatpush2.msra.mxu0 0.0
    %821 = vmatprep.subr.mxu0 0.0
    %822 = vmatpush2.msra.mxu0 0.0
    %823 = vmatprep.subr.mxu0 0.0
    %824 = vmatpush2.msra.mxu0 0.0
    %825 = vmatprep.subr.mxu0 0.0
    %826 = vmatpush2.msra.mxu0 0.0
    %827 = vmatprep.subr.mxu0 0.0
    %828 = vmatpush2.msra.mxu0 0.0
    %829 = vmatprep.subr.mxu0 0.0
    %830 = vmatpush2.msra.mxu0 0.0
    %831 = vmatprep.subr.mxu0 0.0
    %832 = vmatpush2.msra.mxu0 0.0
    %833 = vmatprep.subr.mxu0 0.0
    %834 = vmatpush2.msra.mxu0 0.0
    %835 = vmatprep.subr.mxu0 0.0
    %836 = vmatpush2.msra.mxu0 0.0
    %837 = vmatprep.subr.mxu0 0.0
    %838 = vmatpush2.msra.mxu0 0.0
    %839 = vmatprep.subr.mxu0 0.0
    %840 = vmatpush2.msra.mxu0 0.0
    %841 = vmatprep.subr.mxu0 0.0
    %842 = vmatpush2.msra.mxu0 0.0
    %843 = vmatprep.subr.mxu0 0.0
    %844 = vmatpush2.msra.mxu0 0.0
    %845 = vmatprep.subr.mxu0 0.0
    %846 = vmatpush2.msra.mxu0 0.0
    %847 = vmatprep.subr.mxu0 0.0
    %848 = vmatpush2.msra.mxu0 0.0
    %849 = vmatprep.subr.mxu0 0.0
    %850 = vmatpush2.msra.mxu0 0.0
    %851 = vmatprep.mubr.f32.mxu0 0.0
    %852 = vmatmul.mubr.f32.gmra.mxu0 %v785
    %v853 = vpop.f32.mrf.mxu0
    %v854 = vadd.f32 0.0, %v853
    %v855 = vpop.f32.mrf.mxu0
    %856 = vdwg.mxu0
    %858 = vrot.lane.b32.xlu0 %v854, 24
    %v859 = vpop.permute.xlu0 %858
    %vm861 = vcmask 261312
    %862 = vst.msk [vmem:[#allocation2] sm:$0xff] %vm861, %v859
    %s863 = scalar_lea.vmem [#allocation6], 8
    %v864 = vld [vmem:[%s863] sm:$0xff]
    %866 = vrot.lane.b32.xlu0 %v168, 96
    %v867 = vpop.permute.xlu0 %866
    %v868 = vsel %vm175, %v168, 0
    %v870 = vsel %vm175, %v867, 0
    %872 = vmatprep.subr.mxu0 0.0
    %873 = vmatpush1.xpose.msra.mxu0 0.0
    %874 = vmatprep.subr.mxu0 0.0
    %875 = vmatpush1.xpose.msra.mxu0 0.0
    %876 = vmatprep.subr.mxu0 0.0
    %877 = vmatpush1.xpose.msra.mxu0 0.0
    %878 = vmatprep.subr.mxu0 0.0
    %879 = vmatpush1.xpose.msra.mxu0 0.0
    %880 = vmatprep.subr.mxu0 0.0
    %881 = vmatpush1.xpose.msra.mxu0 0.0
    %882 = vmatprep.subr.mxu0 0.0
    %883 = vmatpush1.xpose.msra.mxu0 0.0
    %884 = vmatprep.subr.mxu0 0.0
    %885 = vmatpush1.xpose.msra.mxu0 0.0
    %886 = vmatprep.subr.mxu0 0.0
    %887 = vmatpush1.xpose.msra.mxu0 0.0
    %888 = vmatprep.subr.mxu0 0.0
    %889 = vmatpush1.xpose.msra.mxu0 0.0
    %890 = vmatprep.subr.mxu0 0.0
    %891 = vmatpush1.xpose.msra.mxu0 0.0
    %892 = vmatprep.subr.mxu0 0.0
    %893 = vmatpush1.xpose.msra.mxu0 0.0
    %894 = vmatprep.subr.mxu0 0.0
    %895 = vmatpush1.xpose.msra.mxu0 0.0
    %896 = vmatprep.subr.mxu0 0.0
    %897 = vmatpush1.xpose.msra.mxu0 0.0
    %898 = vmatprep.subr.mxu0 0.0
    %899 = vmatpush1.xpose.msra.mxu0 0.0
    %900 = vmatprep.subr.mxu0 0.0
    %901 = vmatpush1.xpose.msra.mxu0 0.0
    %902 = vmatprep.subr.mxu0 0.0
    %903 = vmatpush1.xpose.msra.mxu0 %v870
    %904 = vmatprep.subr.mxu0 0.0
    %905 = vmatpush2.xpose.msra.mxu0 0.0
    %906 = vmatprep.subr.mxu0 0.0
    %907 = vmatpush2.xpose.msra.mxu0 0.0
    %908 = vmatprep.subr.mxu0 0.0
    %909 = vmatpush2.xpose.msra.mxu0 0.0
    %910 = vmatprep.subr.mxu0 0.0
    %911 = vmatpush2.xpose.msra.mxu0 0.0
    %912 = vmatprep.subr.mxu0 0.0
    %913 = vmatpush2.xpose.msra.mxu0 0.0
    %914 = vmatprep.subr.mxu0 0.0
    %915 = vmatpush2.xpose.msra.mxu0 0.0
    %916 = vmatprep.subr.mxu0 0.0
    %917 = vmatpush2.xpose.msra.mxu0 0.0
    %918 = vmatprep.subr.mxu0 0.0
    %919 = vmatpush2.xpose.msra.mxu0 0.0
    %920 = vmatprep.subr.mxu0 0.0
    %921 = vmatpush2.xpose.msra.mxu0 0.0
    %922 = vmatprep.subr.mxu0 0.0
    %923 = vmatpush2.xpose.msra.mxu0 0.0
    %924 = vmatprep.subr.mxu0 0.0
    %925 = vmatpush2.xpose.msra.mxu0 0.0
    %926 = vmatprep.subr.mxu0 0.0
    %927 = vmatpush2.xpose.msra.mxu0 0.0
    %928 = vmatprep.subr.mxu0 0.0
    %929 = vmatpush2.xpose.msra.mxu0 0.0
    %930 = vmatprep.subr.mxu0 0.0
    %931 = vmatpush2.xpose.msra.mxu0 0.0
    %932 = vmatprep.subr.mxu0 0.0
    %933 = vmatpush2.xpose.msra.mxu0 0.0
    %934 = vmatprep.subr.mxu0 0.0
    %935 = vmatpush2.xpose.msra.mxu0 0.0
    %936 = vmatprep.mubr.f32.mxu0 0.0
    %937 = vmatmul.mubr.f32.gmra.mxu0 %v868
    %v938 = vpop.f32.mrf.mxu0
    %v939 = vadd.f32 %v864, %v938
    %v940 = vpop.f32.mrf.mxu0
    %941 = vdwg.mxu0
    %v942 = vsel %vm175, %v939, -inf
    %943 = vmax.xlane.f32.xlu0 %v942
    %v944 = vpop.xlane.xlu0 %943
    %v945 = vsub.f32 %v939, %v944
    %v946 = vmul.f32 %v945, 1.442695
    %v947 = vpow.pop %v946
    %v948 = vsel %vm175, %v947, 0.0
    %949 = vadd.xlane.f32.xlu0 %v948
    %v950 = vpop.xlane.xlu0 %949
    %v951 = vrcp.pop %v950
    %v952 = vmul.f32 %v950, %v951
    %v953 = vsub.f32 2.0, %v952
    %v954 = vmul.f32 %v951, %v953
    %v955 = vmul.f32 %v947, %v954
    %956 = vrot.lane.b32.xlu0 %v168, 64
    %v957 = vpop.permute.xlu0 %956
    %v960 = vsel %vm175, %v955, 0
    %962 = vmatprep.subr.mxu0 0.0
    %963 = vmatpush1.msra.mxu0 0.0
    %964 = vmatprep.subr.mxu0 0.0
    %965 = vmatpush1.msra.mxu0 0.0
    %966 = vmatprep.subr.mxu0 0.0
    %967 = vmatpush1.msra.mxu0 0.0
    %968 = vmatprep.subr.mxu0 0.0
    %969 = vmatpush1.msra.mxu0 0.0
    %970 = vmatprep.subr.mxu0 0.0
    %971 = vmatpush1.msra.mxu0 0.0
    %972 = vmatprep.subr.mxu0 0.0
    %973 = vmatpush1.msra.mxu0 0.0
    %974 = vmatprep.subr.mxu0 0.0
    %975 = vmatpush1.msra.mxu0 0.0
    %976 = vmatprep.subr.mxu0 0.0
    %977 = vmatpush1.msra.mxu0 0.0
    %978 = vmatprep.subr.mxu0 0.0
    %979 = vmatpush1.msra.mxu0 0.0
    %980 = vmatprep.subr.mxu0 0.0
    %981 = vmatpush1.msra.mxu0 0.0
    %982 = vmatprep.subr.mxu0 0.0
    %983 = vmatpush1.msra.mxu0 0.0
    %984 = vmatprep.subr.mxu0 0.0
    %985 = vmatpush1.msra.mxu0 0.0
    %986 = vmatprep.subr.mxu0 0.0
    %987 = vmatpush1.msra.mxu0 0.0
    %988 = vmatprep.subr.mxu0 0.0
    %989 = vmatpush1.msra.mxu0 0.0
    %990 = vmatprep.subr.mxu0 0.0
    %991 = vmatpush1.msra.mxu0 0.0
    %992 = vmatprep.subr.mxu0 0.0
    %993 = vmatpush1.msra.mxu0 %v957
    %994 = vmatprep.subr.mxu0 0.0
    %995 = vmatpush2.msra.mxu0 0.0
    %996 = vmatprep.subr.mxu0 0.0
    %997 = vmatpush2.msra.mxu0 0.0
    %998 = vmatprep.subr.mxu0 0.0
    %999 = vmatpush2.msra.mxu0 0.0
    %1000 = vmatprep.subr.mxu0 0.0
    %1001 = vmatpush2.msra.mxu0 0.0
    %1002 = vmatprep.subr.mxu0 0.0
    %1003 = vmatpush2.msra.mxu0 0.0
    %1004 = vmatprep.subr.mxu0 0.0
    %1005 = vmatpush2.msra.mxu0 0.0
    %1006 = vmatprep.subr.mxu0 0.0
    %1007 = vmatpush2.msra.mxu0 0.0
    %1008 = vmatprep.subr.mxu0 0.0
    %1009 = vmatpush2.msra.mxu0 0.0
    %1010 = vmatprep.subr.mxu0 0.0
    %1011 = vmatpush2.msra.mxu0 0.0
    %1012 = vmatprep.subr.mxu0 0.0
    %1013 = vmatpush2.msra.mxu0 0.0
    %1014 = vmatprep.subr.mxu0 0.0
    %1015 = vmatpush2.msra.mxu0 0.0
    %1016 = vmatprep.subr.mxu0 0.0
    %1017 = vmatpush2.msra.mxu0 0.0
    %1018 = vmatprep.subr.mxu0 0.0
    %1019 = vmatpush2.msra.mxu0 0.0
    %1020 = vmatprep.subr.mxu0 0.0
    %1021 = vmatpush2.msra.mxu0 0.0
    %1022 = vmatprep.subr.mxu0 0.0
    %1023 = vmatpush2.msra.mxu0 0.0
    %1024 = vmatprep.subr.mxu0 0.0
    %1025 = vmatpush2.msra.mxu0 0.0
    %1026 = vmatprep.mubr.f32.mxu0 0.0
    %1027 = vmatmul.mubr.f32.gmra.mxu0 %v960
    %v1028 = vpop.f32.mrf.mxu0
    %v1029 = vadd.f32 0.0, %v1028
    %v1030 = vpop.f32.mrf.mxu0
    %1031 = vdwg.mxu0
    %1032 = vst.msk [vmem:[#allocation2 + $0x8] sm:$0xff] %vm175, %v1029
    %1033 = vrot.lane.b32.xlu0 %v168, 120
    %v1034 = vpop.permute.xlu0 %1033
    %1035 = vrot.lane.b32.xlu0 %v168, 88
    %v1036 = vpop.permute.xlu0 %1035
    %v1037 = vsel %vm175, %v1034, 0
    %v1039 = vsel %vm175, %v1036, 0
    %1041 = vmatprep.subr.mxu0 0.0
    %1042 = vmatpush1.xpose.msra.mxu0 0.0
    %1043 = vmatprep.subr.mxu0 0.0
    %1044 = vmatpush1.xpose.msra.mxu0 0.0
    %1045 = vmatprep.subr.mxu0 0.0
    %1046 = vmatpush1.xpose.msra.mxu0 0.0
    %1047 = vmatprep.subr.mxu0 0.0
    %1048 = vmatpush1.xpose.msra.mxu0 0.0
    %1049 = vmatprep.subr.mxu0 0.0
    %1050 = vmatpush1.xpose.msra.mxu0 0.0
    %1051 = vmatprep.subr.mxu0 0.0
    %1052 = vmatpush1.xpose.msra.mxu0 0.0
    %1053 = vmatprep.subr.mxu0 0.0
    %1054 = vmatpush1.xpose.msra.mxu0 0.0
    %1055 = vmatprep.subr.mxu0 0.0
    %1056 = vmatpush1.xpose.msra.mxu0 0.0
    %1057 = vmatprep.subr.mxu0 0.0
    %1058 = vmatpush1.xpose.msra.mxu0 0.0
    %1059 = vmatprep.subr.mxu0 0.0
    %1060 = vmatpush1.xpose.msra.mxu0 0.0
    %1061 = vmatprep.subr.mxu0 0.0
    %1062 = vmatpush1.xpose.msra.mxu0 0.0
    %1063 = vmatprep.subr.mxu0 0.0
    %1064 = vmatpush1.xpose.msra.mxu0 0.0
    %1065 = vmatprep.subr.mxu0 0.0
    %1066 = vmatpush1.xpose.msra.mxu0 0.0
    %1067 = vmatprep.subr.mxu0 0.0
    %1068 = vmatpush1.xpose.msra.mxu0 0.0
    %1069 = vmatprep.subr.mxu0 0.0
    %1070 = vmatpush1.xpose.msra.mxu0 0.0
    %1071 = vmatprep.subr.mxu0 0.0
    %1072 = vmatpush1.xpose.msra.mxu0 %v1039
    %1073 = vmatprep.subr.mxu0 0.0
    %1074 = vmatpush2.xpose.msra.mxu0 0.0
    %1075 = vmatprep.subr.mxu0 0.0
    %1076 = vmatpush2.xpose.msra.mxu0 0.0
    %1077 = vmatprep.subr.mxu0 0.0
    %1078 = vmatpush2.xpose.msra.mxu0 0.0
    %1079 = vmatprep.subr.mxu0 0.0
    %1080 = vmatpush2.xpose.msra.mxu0 0.0
    %1081 = vmatprep.subr.mxu0 0.0
    %1082 = vmatpush2.xpose.msra.mxu0 0.0
    %1083 = vmatprep.subr.mxu0 0.0
    %1084 = vmatpush2.xpose.msra.mxu0 0.0
    %1085 = vmatprep.subr.mxu0 0.0
    %1086 = vmatpush2.xpose.msra.mxu0 0.0
    %1087 = vmatprep.subr.mxu0 0.0
    %1088 = vmatpush2.xpose.msra.mxu0 0.0
    %1089 = vmatprep.subr.mxu0 0.0
    %1090 = vmatpush2.xpose.msra.mxu0 0.0
    %1091 = vmatprep.subr.mxu0 0.0
    %1092 = vmatpush2.xpose.msra.mxu0 0.0
    %1093 = vmatprep.subr.mxu0 0.0
    %1094 = vmatpush2.xpose.msra.mxu0 0.0
    %1095 = vmatprep.subr.mxu0 0.0
    %1096 = vmatpush2.xpose.msra.mxu0 0.0
    %1097 = vmatprep.subr.mxu0 0.0
    %1098 = vmatpush2.xpose.msra.mxu0 0.0
    %1099 = vmatprep.subr.mxu0 0.0
    %1100 = vmatpush2.xpose.msra.mxu0 0.0
    %1101 = vmatprep.subr.mxu0 0.0
    %1102 = vmatpush2.xpose.msra.mxu0 0.0
    %1103 = vmatprep.subr.mxu0 0.0
    %1104 = vmatpush2.xpose.msra.mxu0 0.0
    %1105 = vmatprep.mubr.f32.mxu0 0.0
    %1106 = vmatmul.mubr.f32.gmra.mxu0 %v1037
    %v1107 = vpop.f32.mrf.mxu0
    %v1108 = vadd.f32 %v864, %v1107
    %v1109 = vpop.f32.mrf.mxu0
    %1110 = vdwg.mxu0
    %v1111 = vsel %vm175, %v1108, -inf
    %1112 = vmax.xlane.f32.xlu0 %v1111
    %v1113 = vpop.xlane.xlu0 %1112
    %v1114 = vsub.f32 %v1108, %v1113
    %v1115 = vmul.f32 %v1114, 1.442695
    %v1116 = vpow.pop %v1115
    %v1117 = vsel %vm175, %v1116, 0.0
    %1118 = vadd.xlane.f32.xlu0 %v1117
    %v1119 = vpop.xlane.xlu0 %1118
    %v1120 = vrcp.pop %v1119
    %v1121 = vmul.f32 %v1119, %v1120
    %v1122 = vsub.f32 2.0, %v1121
    %v1123 = vmul.f32 %v1120, %v1122
    %v1124 = vmul.f32 %v1116, %v1123
    %1125 = vrot.lane.b32.xlu0 %v168, 56
    %v1126 = vpop.permute.xlu0 %1125
    %v1129 = vsel %vm175, %v1124, 0
    %1131 = vmatprep.subr.mxu0 0.0
    %1132 = vmatpush1.msra.mxu0 0.0
    %1133 = vmatprep.subr.mxu0 0.0
    %1134 = vmatpush1.msra.mxu0 0.0
    %1135 = vmatprep.subr.mxu0 0.0
    %1136 = vmatpush1.msra.mxu0 0.0
    %1137 = vmatprep.subr.mxu0 0.0
    %1138 = vmatpush1.msra.mxu0 0.0
    %1139 = vmatprep.subr.mxu0 0.0
    %1140 = vmatpush1.msra.mxu0 0.0
    %1141 = vmatprep.subr.mxu0 0.0
    %1142 = vmatpush1.msra.mxu0 0.0
    %1143 = vmatprep.subr.mxu0 0.0
    %1144 = vmatpush1.msra.mxu0 0.0
    %1145 = vmatprep.subr.mxu0 0.0
    %1146 = vmatpush1.msra.mxu0 0.0
    %1147 = vmatprep.subr.mxu0 0.0
    %1148 = vmatpush1.msra.mxu0 0.0
    %1149 = vmatprep.subr.mxu0 0.0
    %1150 = vmatpush1.msra.mxu0 0.0
    %1151 = vmatprep.subr.mxu0 0.0
    %1152 = vmatpush1.msra.mxu0 0.0
    %1153 = vmatprep.subr.mxu0 0.0
    %1154 = vmatpush1.msra.mxu0 0.0
    %1155 = vmatprep.subr.mxu0 0.0
    %1156 = vmatpush1.msra.mxu0 0.0
    %1157 = vmatprep.subr.mxu0 0.0
    %1158 = vmatpush1.msra.mxu0 0.0
    %1159 = vmatprep.subr.mxu0 0.0
    %1160 = vmatpush1.msra.mxu0 0.0
    %1161 = vmatprep.subr.mxu0 0.0
    %1162 = vmatpush1.msra.mxu0 %v1126
    %1163 = vmatprep.subr.mxu0 0.0
    %1164 = vmatpush2.msra.mxu0 0.0
    %1165 = vmatprep.subr.mxu0 0.0
    %1166 = vmatpush2.msra.mxu0 0.0
    %1167 = vmatprep.subr.mxu0 0.0
    %1168 = vmatpush2.msra.mxu0 0.0
    %1169 = vmatprep.subr.mxu0 0.0
    %1170 = vmatpush2.msra.mxu0 0.0
    %1171 = vmatprep.subr.mxu0 0.0
    %1172 = vmatpush2.msra.mxu0 0.0
    %1173 = vmatprep.subr.mxu0 0.0
    %1174 = vmatpush2.msra.mxu0 0.0
    %1175 = vmatprep.subr.mxu0 0.0
    %1176 = vmatpush2.msra.mxu0 0.0
    %1177 = vmatprep.subr.mxu0 0.0
    %1178 = vmatpush2.msra.mxu0 0.0
    %1179 = vmatprep.subr.mxu0 0.0
    %1180 = vmatpush2.msra.mxu0 0.0
    %1181 = vmatprep.subr.mxu0 0.0
    %1182 = vmatpush2.msra.mxu0 0.0
    %1183 = vmatprep.subr.mxu0 0.0
    %1184 = vmatpush2.msra.mxu0 0.0
    %1185 = vmatprep.subr.mxu0 0.0
    %1186 = vmatpush2.msra.mxu0 0.0
    %1187 = vmatprep.subr.mxu0 0.0
    %1188 = vmatpush2.msra.mxu0 0.0
    %1189 = vmatprep.subr.mxu0 0.0
    %1190 = vmatpush2.msra.mxu0 0.0
    %1191 = vmatprep.subr.mxu0 0.0
    %1192 = vmatpush2.msra.mxu0 0.0
    %1193 = vmatprep.subr.mxu0 0.0
    %1194 = vmatpush2.msra.mxu0 0.0
    %1195 = vmatprep.mubr.f32.mxu0 0.0
    %1196 = vmatmul.mubr.f32.gmra.mxu0 %v1129
    %v1197 = vpop.f32.mrf.mxu0
    %v1198 = vadd.f32 0.0, %v1197
    %v1199 = vpop.f32.mrf.mxu0
    %1200 = vdwg.mxu0
    %1202 = vrot.lane.b32.xlu0 %v1198, 8
    %v1203 = vpop.permute.xlu0 %1202
    %1205 = vst.msk [vmem:[#allocation2 + $0x8] sm:$0xff] %vm513, %v1203
    %1206 = vrot.lane.b32.xlu0 %v168, 112
    %v1207 = vpop.permute.xlu0 %1206
    %1208 = vrot.lane.b32.xlu0 %v168, 80
    %v1209 = vpop.permute.xlu0 %1208
    %v1210 = vsel %vm175, %v1207, 0
    %v1212 = vsel %vm175, %v1209, 0
    %1214 = vmatprep.subr.mxu0 0.0
    %1215 = vmatpush1.xpose.msra.mxu0 0.0
    %1216 = vmatprep.subr.mxu0 0.0
    %1217 = vmatpush1.xpose.msra.mxu0 0.0
    %1218 = vmatprep.subr.mxu0 0.0
    %1219 = vmatpush1.xpose.msra.mxu0 0.0
    %1220 = vmatprep.subr.mxu0 0.0
    %1221 = vmatpush1.xpose.msra.mxu0 0.0
    %1222 = vmatprep.subr.mxu0 0.0
    %1223 = vmatpush1.xpose.msra.mxu0 0.0
    %1224 = vmatprep.subr.mxu0 0.0
    %1225 = vmatpush1.xpose.msra.mxu0 0.0
    %1226 = vmatprep.subr.mxu0 0.0
    %1227 = vmatpush1.xpose.msra.mxu0 0.0
    %1228 = vmatprep.subr.mxu0 0.0
    %1229 = vmatpush1.xpose.msra.mxu0 0.0
    %1230 = vmatprep.subr.mxu0 0.0
    %1231 = vmatpush1.xpose.msra.mxu0 0.0
    %1232 = vmatprep.subr.mxu0 0.0
    %1233 = vmatpush1.xpose.msra.mxu0 0.0
    %1234 = vmatprep.subr.mxu0 0.0
    %1235 = vmatpush1.xpose.msra.mxu0 0.0
    %1236 = vmatprep.subr.mxu0 0.0
    %1237 = vmatpush1.xpose.msra.mxu0 0.0
    %1238 = vmatprep.subr.mxu0 0.0
    %1239 = vmatpush1.xpose.msra.mxu0 0.0
    %1240 = vmatprep.subr.mxu0 0.0
    %1241 = vmatpush1.xpose.msra.mxu0 0.0
    %1242 = vmatprep.subr.mxu0 0.0
    %1243 = vmatpush1.xpose.msra.mxu0 0.0
    %1244 = vmatprep.subr.mxu0 0.0
    %1245 = vmatpush1.xpose.msra.mxu0 %v1212
    %1246 = vmatprep.subr.mxu0 0.0
    %1247 = vmatpush2.xpose.msra.mxu0 0.0
    %1248 = vmatprep.subr.mxu0 0.0
    %1249 = vmatpush2.xpose.msra.mxu0 0.0
    %1250 = vmatprep.subr.mxu0 0.0
    %1251 = vmatpush2.xpose.msra.mxu0 0.0
    %1252 = vmatprep.subr.mxu0 0.0
    %1253 = vmatpush2.xpose.msra.mxu0 0.0
    %1254 = vmatprep.subr.mxu0 0.0
    %1255 = vmatpush2.xpose.msra.mxu0 0.0
    %1256 = vmatprep.subr.mxu0 0.0
    %1257 = vmatpush2.xpose.msra.mxu0 0.0
    %1258 = vmatprep.subr.mxu0 0.0
    %1259 = vmatpush2.xpose.msra.mxu0 0.0
    %1260 = vmatprep.subr.mxu0 0.0
    %1261 = vmatpush2.xpose.msra.mxu0 0.0
    %1262 = vmatprep.subr.mxu0 0.0
    %1263 = vmatpush2.xpose.msra.mxu0 0.0
    %1264 = vmatprep.subr.mxu0 0.0
    %1265 = vmatpush2.xpose.msra.mxu0 0.0
    %1266 = vmatprep.subr.mxu0 0.0
    %1267 = vmatpush2.xpose.msra.mxu0 0.0
    %1268 = vmatprep.subr.mxu0 0.0
    %1269 = vmatpush2.xpose.msra.mxu0 0.0
    %1270 = vmatprep.subr.mxu0 0.0
    %1271 = vmatpush2.xpose.msra.mxu0 0.0
    %1272 = vmatprep.subr.mxu0 0.0
    %1273 = vmatpush2.xpose.msra.mxu0 0.0
    %1274 = vmatprep.subr.mxu0 0.0
    %1275 = vmatpush2.xpose.msra.mxu0 0.0
    %1276 = vmatprep.subr.mxu0 0.0
    %1277 = vmatpush2.xpose.msra.mxu0 0.0
    %1278 = vmatprep.mubr.f32.mxu0 0.0
    %1279 = vmatmul.mubr.f32.gmra.mxu0 %v1210
    %v1280 = vpop.f32.mrf.mxu0
    %v1281 = vadd.f32 %v864, %v1280
    %v1282 = vpop.f32.mrf.mxu0
    %1283 = vdwg.mxu0
    %v1284 = vsel %vm175, %v1281, -inf
    %1285 = vmax.xlane.f32.xlu0 %v1284
    %v1286 = vpop.xlane.xlu0 %1285
    %v1287 = vsub.f32 %v1281, %v1286
    %v1288 = vmul.f32 %v1287, 1.442695
    %v1289 = vpow.pop %v1288
    %v1290 = vsel %vm175, %v1289, 0.0
    %1291 = vadd.xlane.f32.xlu0 %v1290
    %v1292 = vpop.xlane.xlu0 %1291
    %v1293 = vrcp.pop %v1292
    %v1294 = vmul.f32 %v1292, %v1293
    %v1295 = vsub.f32 2.0, %v1294
    %v1296 = vmul.f32 %v1293, %v1295
    %v1297 = vmul.f32 %v1289, %v1296
    %1298 = vrot.lane.b32.xlu0 %v168, 48
    %v1299 = vpop.permute.xlu0 %1298
    %v1302 = vsel %vm175, %v1297, 0
    %1304 = vmatprep.subr.mxu0 0.0
    %1305 = vmatpush1.msra.mxu0 0.0
    %1306 = vmatprep.subr.mxu0 0.0
    %1307 = vmatpush1.msra.mxu0 0.0
    %1308 = vmatprep.subr.mxu0 0.0
    %1309 = vmatpush1.msra.mxu0 0.0
    %1310 = vmatprep.subr.mxu0 0.0
    %1311 = vmatpush1.msra.mxu0 0.0
    %1312 = vmatprep.subr.mxu0 0.0
    %1313 = vmatpush1.msra.mxu0 0.0
    %1314 = vmatprep.subr.mxu0 0.0
    %1315 = vmatpush1.msra.mxu0 0.0
    %1316 = vmatprep.subr.mxu0 0.0
    %1317 = vmatpush1.msra.mxu0 0.0
    %1318 = vmatprep.subr.mxu0 0.0
    %1319 = vmatpush1.msra.mxu0 0.0
    %1320 = vmatprep.subr.mxu0 0.0
    %1321 = vmatpush1.msra.mxu0 0.0
    %1322 = vmatprep.subr.mxu0 0.0
    %1323 = vmatpush1.msra.mxu0 0.0
    %1324 = vmatprep.subr.mxu0 0.0
    %1325 = vmatpush1.msra.mxu0 0.0
    %1326 = vmatprep.subr.mxu0 0.0
    %1327 = vmatpush1.msra.mxu0 0.0
    %1328 = vmatprep.subr.mxu0 0.0
    %1329 = vmatpush1.msra.mxu0 0.0
    %1330 = vmatprep.subr.mxu0 0.0
    %1331 = vmatpush1.msra.mxu0 0.0
    %1332 = vmatprep.subr.mxu0 0.0
    %1333 = vmatpush1.msra.mxu0 0.0
    %1334 = vmatprep.subr.mxu0 0.0
    %1335 = vmatpush1.msra.mxu0 %v1299
    %1336 = vmatprep.subr.mxu0 0.0
    %1337 = vmatpush2.msra.mxu0 0.0
    %1338 = vmatprep.subr.mxu0 0.0
    %1339 = vmatpush2.msra.mxu0 0.0
    %1340 = vmatprep.subr.mxu0 0.0
    %1341 = vmatpush2.msra.mxu0 0.0
    %1342 = vmatprep.subr.mxu0 0.0
    %1343 = vmatpush2.msra.mxu0 0.0
    %1344 = vmatprep.subr.mxu0 0.0
    %1345 = vmatpush2.msra.mxu0 0.0
    %1346 = vmatprep.subr.mxu0 0.0
    %1347 = vmatpush2.msra.mxu0 0.0
    %1348 = vmatprep.subr.mxu0 0.0
    %1349 = vmatpush2.msra.mxu0 0.0
    %1350 = vmatprep.subr.mxu0 0.0
    %1351 = vmatpush2.msra.mxu0 0.0
    %1352 = vmatprep.subr.mxu0 0.0
    %1353 = vmatpush2.msra.mxu0 0.0
    %1354 = vmatprep.subr.mxu0 0.0
    %1355 = vmatpush2.msra.mxu0 0.0
    %1356 = vmatprep.subr.mxu0 0.0
    %1357 = vmatpush2.msra.mxu0 0.0
    %1358 = vmatprep.subr.mxu0 0.0
    %1359 = vmatpush2.msra.mxu0 0.0
    %1360 = vmatprep.subr.mxu0 0.0
    %1361 = vmatpush2.msra.mxu0 0.0
    %1362 = vmatprep.subr.mxu0 0.0
    %1363 = vmatpush2.msra.mxu0 0.0
    %1364 = vmatprep.subr.mxu0 0.0
    %1365 = vmatpush2.msra.mxu0 0.0
    %1366 = vmatprep.subr.mxu0 0.0
    %1367 = vmatpush2.msra.mxu0 0.0
    %1368 = vmatprep.mubr.f32.mxu0 0.0
    %1369 = vmatmul.mubr.f32.gmra.mxu0 %v1302
    %v1370 = vpop.f32.mrf.mxu0
    %v1371 = vadd.f32 0.0, %v1370
    %v1372 = vpop.f32.mrf.mxu0
    %1373 = vdwg.mxu0
    %1375 = vrot.lane.b32.xlu0 %v1371, 16
    %v1376 = vpop.permute.xlu0 %1375
    %1378 = vst.msk [vmem:[#allocation2 + $0x8] sm:$0xff] %vm687, %v1376
    %1379 = vrot.lane.b32.xlu0 %v168, 104
    %v1380 = vpop.permute.xlu0 %1379
    %1381 = vrot.lane.b32.xlu0 %v168, 72
    %v1382 = vpop.permute.xlu0 %1381
    %v1383 = vsel %vm175, %v1380, 0
    %v1385 = vsel %vm175, %v1382, 0
    %1387 = vmatprep.subr.mxu0 0.0
    %1388 = vmatpush1.xpose.msra.mxu0 0.0
    %1389 = vmatprep.subr.mxu0 0.0
    %1390 = vmatpush1.xpose.msra.mxu0 0.0
    %1391 = vmatprep.subr.mxu0 0.0
    %1392 = vmatpush1.xpose.msra.mxu0 0.0
    %1393 = vmatprep.subr.mxu0 0.0
    %1394 = vmatpush1.xpose.msra.mxu0 0.0
    %1395 = vmatprep.subr.mxu0 0.0
    %1396 = vmatpush1.xpose.msra.mxu0 0.0
    %1397 = vmatprep.subr.mxu0 0.0
    %1398 = vmatpush1.xpose.msra.mxu0 0.0
    %1399 = vmatprep.subr.mxu0 0.0
    %1400 = vmatpush1.xpose.msra.mxu0 0.0
    %1401 = vmatprep.subr.mxu0 0.0
    %1402 = vmatpush1.xpose.msra.mxu0 0.0
    %1403 = vmatprep.subr.mxu0 0.0
    %1404 = vmatpush1.xpose.msra.mxu0 0.0
    %1405 = vmatprep.subr.mxu0 0.0
    %1406 = vmatpush1.xpose.msra.mxu0 0.0
    %1407 = vmatprep.subr.mxu0 0.0
    %1408 = vmatpush1.xpose.msra.mxu0 0.0
    %1409 = vmatprep.subr.mxu0 0.0
    %1410 = vmatpush1.xpose.msra.mxu0 0.0
    %1411 = vmatprep.subr.mxu0 0.0
    %1412 = vmatpush1.xpose.msra.mxu0 0.0
    %1413 = vmatprep.subr.mxu0 0.0
    %1414 = vmatpush1.xpose.msra.mxu0 0.0
    %1415 = vmatprep.subr.mxu0 0.0
    %1416 = vmatpush1.xpose.msra.mxu0 0.0
    %1417 = vmatprep.subr.mxu0 0.0
    %1418 = vmatpush1.xpose.msra.mxu0 %v1385
    %1419 = vmatprep.subr.mxu0 0.0
    %1420 = vmatpush2.xpose.msra.mxu0 0.0
    %1421 = vmatprep.subr.mxu0 0.0
    %1422 = vmatpush2.xpose.msra.mxu0 0.0
    %1423 = vmatprep.subr.mxu0 0.0
    %1424 = vmatpush2.xpose.msra.mxu0 0.0
    %1425 = vmatprep.subr.mxu0 0.0
    %1426 = vmatpush2.xpose.msra.mxu0 0.0
    %1427 = vmatprep.subr.mxu0 0.0
    %1428 = vmatpush2.xpose.msra.mxu0 0.0
    %1429 = vmatprep.subr.mxu0 0.0
    %1430 = vmatpush2.xpose.msra.mxu0 0.0
    %1431 = vmatprep.subr.mxu0 0.0
    %1432 = vmatpush2.xpose.msra.mxu0 0.0
    %1433 = vmatprep.subr.mxu0 0.0
    %1434 = vmatpush2.xpose.msra.mxu0 0.0
    %1435 = vmatprep.subr.mxu0 0.0
    %1436 = vmatpush2.xpose.msra.mxu0 0.0
    %1437 = vmatprep.subr.mxu0 0.0
    %1438 = vmatpush2.xpose.msra.mxu0 0.0
    %1439 = vmatprep.subr.mxu0 0.0
    %1440 = vmatpush2.xpose.msra.mxu0 0.0
    %1441 = vmatprep.subr.mxu0 0.0
    %1442 = vmatpush2.xpose.msra.mxu0 0.0
    %1443 = vmatprep.subr.mxu0 0.0
    %1444 = vmatpush2.xpose.msra.mxu0 0.0
    %1445 = vmatprep.subr.mxu0 0.0
    %1446 = vmatpush2.xpose.msra.mxu0 0.0
    %1447 = vmatprep.subr.mxu0 0.0
    %1448 = vmatpush2.xpose.msra.mxu0 0.0
    %1449 = vmatprep.subr.mxu0 0.0
    %1450 = vmatpush2.xpose.msra.mxu0 0.0
    %1451 = vmatprep.mubr.f32.mxu0 0.0
    %1452 = vmatmul.mubr.f32.gmra.mxu0 %v1383
    %v1453 = vpop.f32.mrf.mxu0
    %v1454 = vadd.f32 %v864, %v1453
    %v1455 = vpop.f32.mrf.mxu0
    %1456 = vdwg.mxu0
    %v1457 = vsel %vm175, %v1454, -inf
    %1458 = vmax.xlane.f32.xlu0 %v1457
    %v1459 = vpop.xlane.xlu0 %1458
    %v1460 = vsub.f32 %v1454, %v1459
    %v1461 = vmul.f32 %v1460, 1.442695
    %v1462 = vpow.pop %v1461
    %v1463 = vsel %vm175, %v1462, 0.0
    %1464 = vadd.xlane.f32.xlu0 %v1463
    %v1465 = vpop.xlane.xlu0 %1464
    %v1466 = vrcp.pop %v1465
    %v1467 = vmul.f32 %v1465, %v1466
    %v1468 = vsub.f32 2.0, %v1467
    %v1469 = vmul.f32 %v1466, %v1468
    %v1470 = vmul.f32 %v1462, %v1469
    %1471 = vrot.lane.b32.xlu0 %v168, 40
    %v1472 = vpop.permute.xlu0 %1471
    %v1475 = vsel %vm175, %v1470, 0
    %1477 = vmatprep.subr.mxu0 0.0
    %1478 = vmatpush1.msra.mxu0 0.0
    %1479 = vmatprep.subr.mxu0 0.0
    %1480 = vmatpush1.msra.mxu0 0.0
    %1481 = vmatprep.subr.mxu0 0.0
    %1482 = vmatpush1.msra.mxu0 0.0
    %1483 = vmatprep.subr.mxu0 0.0
    %1484 = vmatpush1.msra.mxu0 0.0
    %1485 = vmatprep.subr.mxu0 0.0
    %1486 = vmatpush1.msra.mxu0 0.0
    %1487 = vmatprep.subr.mxu0 0.0
    %1488 = vmatpush1.msra.mxu0 0.0
    %1489 = vmatprep.subr.mxu0 0.0
    %1490 = vmatpush1.msra.mxu0 0.0
    %1491 = vmatprep.subr.mxu0 0.0
    %1492 = vmatpush1.msra.mxu0 0.0
    %1493 = vmatprep.subr.mxu0 0.0
    %1494 = vmatpush1.msra.mxu0 0.0
    %1495 = vmatprep.subr.mxu0 0.0
    %1496 = vmatpush1.msra.mxu0 0.0
    %1497 = vmatprep.subr.mxu0 0.0
    %1498 = vmatpush1.msra.mxu0 0.0
    %1499 = vmatprep.subr.mxu0 0.0
    %1500 = vmatpush1.msra.mxu0 0.0
    %1501 = vmatprep.subr.mxu0 0.0
    %1502 = vmatpush1.msra.mxu0 0.0
    %1503 = vmatprep.subr.mxu0 0.0
    %1504 = vmatpush1.msra.mxu0 0.0
    %1505 = vmatprep.subr.mxu0 0.0
    %1506 = vmatpush1.msra.mxu0 0.0
    %1507 = vmatprep.subr.mxu0 0.0
    %1508 = vmatpush1.msra.mxu0 %v1472
    %1509 = vmatprep.subr.mxu0 0.0
    %1510 = vmatpush2.msra.mxu0 0.0
    %1511 = vmatprep.subr.mxu0 0.0
    %1512 = vmatpush2.msra.mxu0 0.0
    %1513 = vmatprep.subr.mxu0 0.0
    %1514 = vmatpush2.msra.mxu0 0.0
    %1515 = vmatprep.subr.mxu0 0.0
    %1516 = vmatpush2.msra.mxu0 0.0
    %1517 = vmatprep.subr.mxu0 0.0
    %1518 = vmatpush2.msra.mxu0 0.0
    %1519 = vmatprep.subr.mxu0 0.0
    %1520 = vmatpush2.msra.mxu0 0.0
    %1521 = vmatprep.subr.mxu0 0.0
    %1522 = vmatpush2.msra.mxu0 0.0
    %1523 = vmatprep.subr.mxu0 0.0
    %1524 = vmatpush2.msra.mxu0 0.0
    %1525 = vmatprep.subr.mxu0 0.0
    %1526 = vmatpush2.msra.mxu0 0.0
    %1527 = vmatprep.subr.mxu0 0.0
    %1528 = vmatpush2.msra.mxu0 0.0
    %1529 = vmatprep.subr.mxu0 0.0
    %1530 = vmatpush2.msra.mxu0 0.0
    %1531 = vmatprep.subr.mxu0 0.0
    %1532 = vmatpush2.msra.mxu0 0.0
    %1533 = vmatprep.subr.mxu0 0.0
    %1534 = vmatpush2.msra.mxu0 0.0
    %1535 = vmatprep.subr.mxu0 0.0
    %1536 = vmatpush2.msra.mxu0 0.0
    %1537 = vmatprep.subr.mxu0 0.0
    %1538 = vmatpush2.msra.mxu0 0.0
    %1539 = vmatprep.subr.mxu0 0.0
    %1540 = vmatpush2.msra.mxu0 0.0
    %1541 = vmatprep.mubr.f32.mxu0 0.0
    %1542 = vmatmul.mubr.f32.gmra.mxu0 %v1475
    %v1543 = vpop.f32.mrf.mxu0
    %v1544 = vadd.f32 0.0, %v1543
    %v1545 = vpop.f32.mrf.mxu0
    %1546 = vdwg.mxu0
    %1548 = vrot.lane.b32.xlu0 %v1544, 24
    %v1549 = vpop.permute.xlu0 %1548
    %1551 = vst.msk [vmem:[#allocation2 + $0x8] sm:$0xff] %vm861, %v1549
    %v1552 = vld [vmem:[#allocation2] sm:$0xff]
    %v1553 = vld [vmem:[#allocation2 + $0x8] sm:$0xff]
    %v1554 = vld [vmem:[%s4] sm:$0xff]
    %v1555 = vld [vmem:[%s4 + $0x8] sm:$0xff]
    %v1556 = vld [vmem:[%s4 + $0x10] sm:$0xff]
    %v1557 = vld [vmem:[%s4 + $0x18] sm:$0xff]
    %v1558 = vld [vmem:[%s5] sm:$0x1]
    %v1560 = vlaneseq
    %v1561 = vshrl.u32 %v1560, 7
    %v1562 = vsub.s32 0, %v1561
    %v1563 = vrot.slane %v1558, %v1562
    %v1566 = vsel %vm89, %v1552, 0
    %v1569 = vsel %vm89, %v1553, 0
    %1571 = vmatprep.subr.mxu0 0.0
    %1572 = vmatpush1.msra.mxu0 0.0
    %1573 = vmatprep.subr.mxu0 0.0
    %1574 = vmatpush1.msra.mxu0 0.0
    %1575 = vmatprep.subr.mxu0 0.0
    %1576 = vmatpush1.msra.mxu0 0.0
    %1577 = vmatprep.subr.mxu0 0.0
    %1578 = vmatpush1.msra.mxu0 0.0
    %1579 = vmatprep.subr.mxu0 0.0
    %1580 = vmatpush1.msra.mxu0 0.0
    %1581 = vmatprep.subr.mxu0 0.0
    %1582 = vmatpush1.msra.mxu0 0.0
    %1583 = vmatprep.subr.mxu0 0.0
    %1584 = vmatpush1.msra.mxu0 0.0
    %1585 = vmatprep.subr.mxu0 0.0
    %1586 = vmatpush1.msra.mxu0 0.0
    %1587 = vmatprep.subr.mxu0 0.0
    %1588 = vmatpush1.msra.mxu0 0.0
    %1589 = vmatprep.subr.mxu0 0.0
    %1590 = vmatpush1.msra.mxu0 0.0
    %1591 = vmatprep.subr.mxu0 0.0
    %1592 = vmatpush1.msra.mxu0 0.0
    %1593 = vmatprep.subr.mxu0 0.0
    %1594 = vmatpush1.msra.mxu0 0.0
    %1595 = vmatprep.subr.mxu0 0.0
    %1596 = vmatpush1.msra.mxu0 %v1557
    %1597 = vmatprep.subr.mxu0 0.0
    %1598 = vmatpush1.msra.mxu0 %v1556
    %1599 = vmatprep.subr.mxu0 0.0
    %1600 = vmatpush1.msra.mxu0 %v1555
    %1601 = vmatprep.subr.mxu0 0.0
    %1602 = vmatpush1.msra.mxu0 %v1554
    %1603 = vmatprep.subr.mxu0 0.0
    %1604 = vmatpush2.msra.mxu0 0.0
    %1605 = vmatprep.subr.mxu0 0.0
    %1606 = vmatpush2.msra.mxu0 0.0
    %1607 = vmatprep.subr.mxu0 0.0
    %1608 = vmatpush2.msra.mxu0 0.0
    %1609 = vmatprep.subr.mxu0 0.0
    %1610 = vmatpush2.msra.mxu0 0.0
    %1611 = vmatprep.subr.mxu0 0.0
    %1612 = vmatpush2.msra.mxu0 0.0
    %1613 = vmatprep.subr.mxu0 0.0
    %1614 = vmatpush2.msra.mxu0 0.0
    %1615 = vmatprep.subr.mxu0 0.0
    %1616 = vmatpush2.msra.mxu0 0.0
    %1617 = vmatprep.subr.mxu0 0.0
    %1618 = vmatpush2.msra.mxu0 0.0
    %1619 = vmatprep.subr.mxu0 0.0
    %1620 = vmatpush2.msra.mxu0 0.0
    %1621 = vmatprep.subr.mxu0 0.0
    %1622 = vmatpush2.msra.mxu0 0.0
    %1623 = vmatprep.subr.mxu0 0.0
    %1624 = vmatpush2.msra.mxu0 0.0
    %1625 = vmatprep.subr.mxu0 0.0
    %1626 = vmatpush2.msra.mxu0 0.0
    %1627 = vmatprep.subr.mxu0 0.0
    %1628 = vmatpush2.msra.mxu0 0.0
    %1629 = vmatprep.subr.mxu0 0.0
    %1630 = vmatpush2.msra.mxu0 0.0
    %1631 = vmatprep.subr.mxu0 0.0
    %1632 = vmatpush2.msra.mxu0 0.0
    %1633 = vmatprep.subr.mxu0 0.0
    %1634 = vmatpush2.msra.mxu0 0.0
    %1635 = vmatprep.mubr.f32.mxu0 0.0
    %1636 = vmatmul.mubr.f32.gmra.mxu0 %v1566
    %v1637 = vpop.f32.mrf.mxu0
    %v1638 = vadd.f32 %v1563, %v1637
    %v1639 = vpop.f32.mrf.mxu0
    %1640 = vmatprep.mubr.f32.mxu0 0.0
    %1641 = vmatmul.mubr.f32.gmra.mxu0 %v1569
    %v1642 = vpop.f32.mrf.mxu0
    %v1643 = vadd.f32 %v1563, %v1642
    %v1644 = vpop.f32.mrf.mxu0
    %1645 = vdwg.mxu0
    %v1646 = vadd.f32 %v1638, %v76
    %v1647 = vadd.f32 %v1643, %v77
    %v1648 = vld [vmem:[%s6] sm:$0x1]
    %v1649 = vld [vmem:[%s7] sm:$0x1]
    %v1650 = vsel %vm89, %v1646, 0.0
    %1651 = vadd.xlane.f32.xlu0 %v1650
    %v1652 = vpop.xlane.xlu0 %1651
    %v1653 = vsel %vm89, %v1647, 0.0
    %1654 = vadd.xlane.f32.xlu0 %v1653
    %v1655 = vpop.xlane.xlu0 %1654
    %v1656 = vrcp.pop 32.0
    %v1657 = vmul.f32 %v1652, %v1656
    %v1658 = vmul.f32 %v1655, %v1656
    %v1659 = vsub.f32 %v1646, %v1657
    %v1660 = vsub.f32 %v1647, %v1658
    %v1661 = vmul.f32 %v1659, %v1659
    %v1662 = vmul.f32 %v1660, %v1660
    %v1663 = vsel %vm89, %v1661, 0.0
    %1664 = vadd.xlane.f32.xlu0 %v1663
    %v1665 = vpop.xlane.xlu0 %1664
    %v1666 = vsel %vm89, %v1662, 0.0
    %1667 = vadd.xlane.f32.xlu0 %v1666
    %v1668 = vpop.xlane.xlu0 %1667
    %v1669 = vmul.f32 %v1665, %v1656
    %v1670 = vmul.f32 %v1668, %v1656
    %v1671 = vadd.f32 %v1669, 1e-05
    %v1672 = vadd.f32 %v1670, 1e-05
    %v1673 = vrsqrt.pop %v1671
    %v1674 = vrsqrt.pop %v1672
    %v1675 = vmul.f32 %v1659, %v1673
    %v1676 = vmul.f32 %v1660, %v1674
    %v1678 = vlaneseq
    %v1679 = vshrl.u32 %v1678, 7
    %v1680 = vsub.s32 0, %v1679
    %v1681 = vrot.slane %v1648, %v1680
    %v1683 = vmul.f32 %v1675, %v1681
    %v1684 = vmul.f32 %v1676, %v1681
    %v1686 = vlaneseq
    %v1687 = vshrl.u32 %v1686, 7
    %v1688 = vsub.s32 0, %v1687
    %v1689 = vrot.slane %v1649, %v1688
    %v1691 = vadd.f32 %v1683, %v1689
    %v1692 = vadd.f32 %v1684, %v1689
    %v1693 = vld [vmem:[%s8] sm:$0xff]
    %v1694 = vld [vmem:[%s8 + $0x8] sm:$0xff]
    %v1695 = vld [vmem:[%s8 + $0x10] sm:$0xff]
    %v1696 = vld [vmem:[%s8 + $0x18] sm:$0xff]
    %v1697 = vld [vmem:[%s9] sm:$0x1]
    %v1699 = vlaneseq
    %v1700 = vshrl.u32 %v1699, 7
    %v1701 = vsub.s32 0, %v1700
    %v1702 = vrot.slane %v1697, %v1701
    %v1705 = vsel %vm89, %v1691, 0
    %v1708 = vsel %vm89, %v1692, 0
    %1710 = vmatprep.subr.mxu0 0.0
    %1711 = vmatpush1.msra.mxu0 0.0
    %1712 = vmatprep.subr.mxu0 0.0
    %1713 = vmatpush1.msra.mxu0 0.0
    %1714 = vmatprep.subr.mxu0 0.0
    %1715 = vmatpush1.msra.mxu0 0.0
    %1716 = vmatprep.subr.mxu0 0.0
    %1717 = vmatpush1.msra.mxu0 0.0
    %1718 = vmatprep.subr.mxu0 0.0
    %1719 = vmatpush1.msra.mxu0 0.0
    %1720 = vmatprep.subr.mxu0 0.0
    %1721 = vmatpush1.msra.mxu0 0.0
    %1722 = vmatprep.subr.mxu0 0.0
    %1723 = vmatpush1.msra.mxu0 0.0
    %1724 = vmatprep.subr.mxu0 0.0
    %1725 = vmatpush1.msra.mxu0 0.0
    %1726 = vmatprep.subr.mxu0 0.0
    %1727 = vmatpush1.msra.mxu0 0.0
    %1728 = vmatprep.subr.mxu0 0.0
    %1729 = vmatpush1.msra.mxu0 0.0
    %1730 = vmatprep.subr.mxu0 0.0
    %1731 = vmatpush1.msra.mxu0 0.0
    %1732 = vmatprep.subr.mxu0 0.0
    %1733 = vmatpush1.msra.mxu0 0.0
    %1734 = vmatprep.subr.mxu0 0.0
    %1735 = vmatpush1.msra.mxu0 %v1696
    %1736 = vmatprep.subr.mxu0 0.0
    %1737 = vmatpush1.msra.mxu0 %v1695
    %1738 = vmatprep.subr.mxu0 0.0
    %1739 = vmatpush1.msra.mxu0 %v1694
    %1740 = vmatprep.subr.mxu0 0.0
    %1741 = vmatpush1.msra.mxu0 %v1693
    %1742 = vmatprep.subr.mxu0 0.0
    %1743 = vmatpush2.msra.mxu0 0.0
    %1744 = vmatprep.subr.mxu0 0.0
    %1745 = vmatpush2.msra.mxu0 0.0
    %1746 = vmatprep.subr.mxu0 0.0
    %1747 = vmatpush2.msra.mxu0 0.0
    %1748 = vmatprep.subr.mxu0 0.0
    %1749 = vmatpush2.msra.mxu0 0.0
    %1750 = vmatprep.subr.mxu0 0.0
    %1751 = vmatpush2.msra.mxu0 0.0
    %1752 = vmatprep.subr.mxu0 0.0
    %1753 = vmatpush2.msra.mxu0 0.0
    %1754 = vmatprep.subr.mxu0 0.0
    %1755 = vmatpush2.msra.mxu0 0.0
    %1756 = vmatprep.subr.mxu0 0.0
    %1757 = vmatpush2.msra.mxu0 0.0
    %1758 = vmatprep.subr.mxu0 0.0
    %1759 = vmatpush2.msra.mxu0 0.0
    %1760 = vmatprep.subr.mxu0 0.0
    %1761 = vmatpush2.msra.mxu0 0.0
    %1762 = vmatprep.subr.mxu0 0.0
    %1763 = vmatpush2.msra.mxu0 0.0
    %1764 = vmatprep.subr.mxu0 0.0
    %1765 = vmatpush2.msra.mxu0 0.0
    %1766 = vmatprep.subr.mxu0 0.0
    %1767 = vmatpush2.msra.mxu0 0.0
    %1768 = vmatprep.subr.mxu0 0.0
    %1769 = vmatpush2.msra.mxu0 0.0
    %1770 = vmatprep.subr.mxu0 0.0
    %1771 = vmatpush2.msra.mxu0 0.0
    %1772 = vmatprep.subr.mxu0 0.0
    %1773 = vmatpush2.msra.mxu0 0.0
    %1774 = vmatprep.mubr.f32.mxu0 0.0
    %1775 = vmatmul.mubr.f32.gmra.mxu0 %v1705
    %v1776 = vpop.f32.mrf.mxu0
    %v1777 = vadd.f32 %v1702, %v1776
    %v1778 = vpop.f32.mrf.mxu0
    %1779 = vmatprep.mubr.f32.mxu0 0.0
    %1780 = vmatmul.mubr.f32.gmra.mxu0 %v1708
    %v1781 = vpop.f32.mrf.mxu0
    %v1782 = vadd.f32 %v1702, %v1781
    %v1783 = vpop.f32.mrf.mxu0
    %1784 = vdwg.mxu0
    %v1785 = vmax.f32 %v1777, 0.0
    %v1786 = vmax.f32 %v1782, 0.0
    %v1787 = vld [vmem:[%s10] sm:$0xff]
    %v1788 = vld [vmem:[%s10 + $0x8] sm:$0xff]
    %v1789 = vld [vmem:[%s10 + $0x10] sm:$0xff]
    %v1790 = vld [vmem:[%s10 + $0x18] sm:$0xff]
    %v1791 = vld [vmem:[%s10 + $0x20] sm:$0xff]
    %v1792 = vld [vmem:[%s10 + $0x28] sm:$0xff]
    %v1793 = vld [vmem:[%s10 + $0x30] sm:$0xff]
    %v1794 = vld [vmem:[%s10 + $0x38] sm:$0xff]
    %v1795 = vld [vmem:[%s11] sm:$0x1]
    %v1797 = vlaneseq
    %v1798 = vshrl.u32 %v1797, 7
    %v1799 = vsub.s32 0, %v1798
    %v1800 = vrot.slane %v1795, %v1799
    %vm1802 = vcmask 523264
    %v1804 = vsel %vm1802, %v1785, 0
    %v1807 = vsel %vm1802, %v1786, 0
    %1809 = vmatprep.subr.mxu0 0.0
    %1810 = vmatpush1.msra.mxu0 0.0
    %1811 = vmatprep.subr.mxu0 0.0
    %1812 = vmatpush1.msra.mxu0 0.0
    %1813 = vmatprep.subr.mxu0 0.0
    %1814 = vmatpush1.msra.mxu0 0.0
    %1815 = vmatprep.subr.mxu0 0.0
    %1816 = vmatpush1.msra.mxu0 0.0
    %1817 = vmatprep.subr.mxu0 0.0
    %1818 = vmatpush1.msra.mxu0 0.0
    %1819 = vmatprep.subr.mxu0 0.0
    %1820 = vmatpush1.msra.mxu0 0.0
    %1821 = vmatprep.subr.mxu0 0.0
    %1822 = vmatpush1.msra.mxu0 0.0
    %1823 = vmatprep.subr.mxu0 0.0
    %1824 = vmatpush1.msra.mxu0 0.0
    %1825 = vmatprep.subr.mxu0 0.0
    %1826 = vmatpush1.msra.mxu0 %v1794
    %1827 = vmatprep.subr.mxu0 0.0
    %1828 = vmatpush1.msra.mxu0 %v1793
    %1829 = vmatprep.subr.mxu0 0.0
    %1830 = vmatpush1.msra.mxu0 %v1792
    %1831 = vmatprep.subr.mxu0 0.0
    %1832 = vmatpush1.msra.mxu0 %v1791
    %1833 = vmatprep.subr.mxu0 0.0
    %1834 = vmatpush1.msra.mxu0 %v1790
    %1835 = vmatprep.subr.mxu0 0.0
    %1836 = vmatpush1.msra.mxu0 %v1789
    %1837 = vmatprep.subr.mxu0 0.0
    %1838 = vmatpush1.msra.mxu0 %v1788
    %1839 = vmatprep.subr.mxu0 0.0
    %1840 = vmatpush1.msra.mxu0 %v1787
    %1841 = vmatprep.subr.mxu0 0.0
    %1842 = vmatpush2.msra.mxu0 0.0
    %1843 = vmatprep.subr.mxu0 0.0
    %1844 = vmatpush2.msra.mxu0 0.0
    %1845 = vmatprep.subr.mxu0 0.0
    %1846 = vmatpush2.msra.mxu0 0.0
    %1847 = vmatprep.subr.mxu0 0.0
    %1848 = vmatpush2.msra.mxu0 0.0
    %1849 = vmatprep.subr.mxu0 0.0
    %1850 = vmatpush2.msra.mxu0 0.0
    %1851 = vmatprep.subr.mxu0 0.0
    %1852 = vmatpush2.msra.mxu0 0.0
    %1853 = vmatprep.subr.mxu0 0.0
    %1854 = vmatpush2.msra.mxu0 0.0
    %1855 = vmatprep.subr.mxu0 0.0
    %1856 = vmatpush2.msra.mxu0 0.0
    %1857 = vmatprep.subr.mxu0 0.0
    %1858 = vmatpush2.msra.mxu0 0.0
    %1859 = vmatprep.subr.mxu0 0.0
    %1860 = vmatpush2.msra.mxu0 0.0
    %1861 = vmatprep.subr.mxu0 0.0
    %1862 = vmatpush2.msra.mxu0 0.0
    %1863 = vmatprep.subr.mxu0 0.0
    %1864 = vmatpush2.msra.mxu0 0.0
    %1865 = vmatprep.subr.mxu0 0.0
    %1866 = vmatpush2.msra.mxu0 0.0
    %1867 = vmatprep.subr.mxu0 0.0
    %1868 = vmatpush2.msra.mxu0 0.0
    %1869 = vmatprep.subr.mxu0 0.0
    %1870 = vmatpush2.msra.mxu0 0.0
    %1871 = vmatprep.subr.mxu0 0.0
    %1872 = vmatpush2.msra.mxu0 0.0
    %1873 = vmatprep.mubr.f32.mxu0 0.0
    %1874 = vmatmul.mubr.f32.gmra.mxu0 %v1804
    %v1875 = vpop.f32.mrf.mxu0
    %v1876 = vadd.f32 %v1800, %v1875
    %v1877 = vpop.f32.mrf.mxu0
    %1878 = vmatprep.mubr.f32.mxu0 0.0
    %1879 = vmatmul.mubr.f32.gmra.mxu0 %v1807
    %v1880 = vpop.f32.mrf.mxu0
    %v1881 = vadd.f32 %v1800, %v1880
    %v1882 = vpop.f32.mrf.mxu0
    %1883 = vdwg.mxu0
    %v1884 = vadd.f32 %v1876, %v1691
    %v1885 = vadd.f32 %v1881, %v1692
    %v1886 = vld [vmem:[%s12] sm:$0x1]
    %v1887 = vld [vmem:[%s13] sm:$0x1]
    %v1888 = vsel %vm89, %v1884, 0.0
    %1889 = vadd.xlane.f32.xlu0 %v1888
    %v1890 = vpop.xlane.xlu0 %1889
    %v1891 = vsel %vm89, %v1885, 0.0
    %1892 = vadd.xlane.f32.xlu0 %v1891
    %v1893 = vpop.xlane.xlu0 %1892
    %v1894 = vmul.f32 %v1890, %v1656
    %v1895 = vmul.f32 %v1893, %v1656
    %v1896 = vsub.f32 %v1884, %v1894
    %v1897 = vsub.f32 %v1885, %v1895
    %v1898 = vmul.f32 %v1896, %v1896
    %v1899 = vmul.f32 %v1897, %v1897
    %v1900 = vsel %vm89, %v1898, 0.0
    %1901 = vadd.xlane.f32.xlu0 %v1900
    %v1902 = vpop.xlane.xlu0 %1901
    %v1903 = vsel %vm89, %v1899, 0.0
    %1904 = vadd.xlane.f32.xlu0 %v1903
    %v1905 = vpop.xlane.xlu0 %1904
    %v1906 = vmul.f32 %v1902, %v1656
    %v1907 = vmul.f32 %v1905, %v1656
    %v1908 = vadd.f32 %v1906, 1e-05
    %v1909 = vadd.f32 %v1907, 1e-05
    %v1910 = vrsqrt.pop %v1908
    %v1911 = vrsqrt.pop %v1909
    %v1912 = vmul.f32 %v1896, %v1910
    %v1913 = vmul.f32 %v1897, %v1911
    %v1915 = vlaneseq
    %v1916 = vshrl.u32 %v1915, 7
    %v1917 = vsub.s32 0, %v1916
    %v1918 = vrot.slane %v1886, %v1917
    %v1920 = vmul.f32 %v1912, %v1918
    %v1921 = vmul.f32 %v1913, %v1918
    %v1923 = vlaneseq
    %v1924 = vshrl.u32 %v1923, 7
    %v1925 = vsub.s32 0, %v1924
    %v1926 = vrot.slane %v1887, %v1925
    %v1928 = vadd.f32 %v1920, %v1926
    %v1929 = vadd.f32 %v1921, %v1926
    %1930 = vst.msk [vmem:[#allocation8] sm:$0xff] %vm89, %v1928
    %1931 = vst.msk [vmem:[#allocation8 + $0x8] sm:$0xff] %vm89, %v1929
    // Predicated region
    $region66: #{tpu_custom_call.1} parent=1 // pred_check
      _
    $region67: #{tpu_custom_call.1} parent=1 // pred_check_branch
      %1933 = sbr.rel (0) target = $region69
    $region68: #{tpu_custom_call.1} parent=1 // pred_region
      %s1935 = ssub.s32 256, 256
      %1936 = vsyncadd [#allocation5], %s1935
      %s1937 = sshll.u32 [#allocation8], 4
      %s1938 = int_to_ptr.vmem [resolvable:$true] %s1937
      %1943 = dma.vmem_to_hbm [thread:$0]  %s1938, 256, %s14, [#allocation5], 128, 128, 8
    $region69: #{tpu_custom_call.1} parent=1 // pred_fallthru
      _
    // Predicated region
    $region70: #{tpu_custom_call.1} parent=1 // pred_check
      _
    $region71: #{tpu_custom_call.1} parent=1 // pred_check_branch
      %1945 = sbr.rel (0) target = $region73
    $region72: #{tpu_custom_call.1} parent=1 // pred_region
      %1946 = dma.done [#allocation5], 256
    $region73: #{tpu_custom_call.1} parent=1 // pred_fallthru
      _
    %1947 = vsyncpa [#allocation4], 1
    %1948 = vsyncpa [#allocation7], 1
    %1949 = vsyncpa [#allocation5], 1

</llo_original>
